<compile_context>
chip_gen: v7x
topology: tpu7x:2x2x1
jax: 0.10.0
libtpu: 0.0.40
codegen_flags: <defaults>
</compile_context>

<pallas_src>
import jax
import jax.numpy as jnp
from jax.experimental import pallas as pl
from jax.experimental.pallas import tpu as pltpu

EPS_BN = 1e-5
NUM_LAYERS = 16

# Set to jnp.bfloat16 on v6e/v7x at production sizes to hit the fast MXU path
# (accumulation stays f32).  Kept at f32 here so the numerical check against
# the HIGHEST-precision reference stays tight.
MATMUL_DTYPE = jnp.float32


def _mm(a, b):
    """(m,k) @ (k,n) on the MXU with f32 accumulation."""
    return jnp.dot(a.astype(MATMUL_DTYPE), b.astype(MATMUL_DTYPE),
                   preferred_element_type=jnp.float32)


def _mm_ta(a, b):
    """a^T @ b (contract dim 0 of both operands) without an explicit transpose."""
    return jax.lax.dot_general(
        a.astype(MATMUL_DTYPE), b.astype(MATMUL_DTYPE),
        dimension_numbers=(((0,), (0,)), ((), ())),
        preferred_element_type=jnp.float32)


# ----------------------------------------------------------------------------
# Kernel
# ----------------------------------------------------------------------------
def _make_pct_kernel(B, N, C):
    C4 = C // 4
    inv_cnt = 1.0 / float(B * N)

    def bn_relu(t, gamma, beta):
        # BatchNorm1d (training mode) over (batch, points) == the lane axis of
        # the (C, B*N) layout; one pass: var = E[t^2] - mean^2.
        s = jnp.sum(t, axis=1, keepdims=True)
        ss = jnp.sum(t * t, axis=1, keepdims=True)
        mean = s * inv_cnt
        var = ss * inv_cnt - mean * mean
        scale = jax.lax.rsqrt(var + EPS_BN) * gamma
        return jnp.maximum((t - mean) * scale + beta, 0.0)

    def kernel(x_ref, w1_ref, g1_ref, b1_ref, w2_ref, g2_ref, b2_ref,
               kvw_ref, vb_ref, tw_ref, tb_ref, gam_ref, bet_ref,
               out_ref, cur_ref):
        layer = pl.program_id(0)

        @pl.when(layer == 0)
        def _stem():  # conv1 -> bn1 -> relu -> conv2 -> bn2 -> relu
            h = _mm(w1_ref[...], x_ref[...])
            h = bn_relu(h, g1_ref[...], b1_ref[...])
            h = _mm(w2_ref[...], h)
            cur_ref[...] = bn_relu(h, g2_ref[...], b2_ref[...])

        x = cur_ref[...]                                   # (C, B*N)
        kvw = kvw_ref[0]                                   # (C//4 + C, C)
        vb = vb_ref[0]
        tw = tw_ref[0]
        tb = tb_ref[0]
        gamma = gam_ref[0]
        beta = bet_ref[0]

        # Fused q/k + v projection: one matmul, then sublane slices.
        kv = _mm(kvw, x)                                   # (C//4 + C, B*N)
        x_k = kv[:C4, :]                                   # (C//4, B*N)
        x_v = kv[C4:, :] + vb                              # (C,    B*N)

        # Attention is per-batch (torch.bmm); B is small and static.
        xr_parts = []
        for b in range(B):
            lo, hi = b * N, (b + 1) * N
            xk_b = x_k[:, lo:hi]                           # (C//4, N)
            xv_b = x_v[:, lo:hi]                           # (C,    N)
            energy = _mm_ta(xk_b, xk_b)                    # (N, N); q/k share weights
            e = jnp.exp(energy - jnp.max(energy, axis=-1, keepdims=True))
            att = e * pl.reciprocal(jnp.sum(e, axis=-1, keepdims=True),
                                    approx=True)           # softmax(dim=-1)
            att = att * pl.reciprocal(
                1e-9 + jnp.sum(att, axis=0, keepdims=True),
                approx=True)                               # /= attention.sum(dim=1)
            xr_parts.append(_mm(xv_b, att))                # (C, N)
        x_r = xr_parts[0] if B == 1 else jnp.concatenate(xr_parts, axis=1)

        t = _mm(tw, x - x_r) + tb                          # trans_conv
        new_x = x + bn_relu(t, gamma, beta)                # after_norm + relu + residual
        cur_ref[...] = new_x                               # stays resident in VMEM
        out_ref[0] = new_x                                 # this layer's output slice

    return kernel


# ----------------------------------------------------------------------------
# Wrapper
# ----------------------------------------------------------------------------
def _pack_sa_params(sa):
    # x13..x16 reuse sa12's parameters, exactly like the PyTorch forward().
    idx = list(range(12)) + [11, 11, 11, 11]
    kvw = jnp.stack([jnp.concatenate([sa[i]["qk_w"], sa[i]["v_w"]], axis=0)
                     for i in idx])                        # (16, C//4 + C, C)
    vb = jnp.stack([sa[i]["v_b"] for i in idx])            # (16, C, 1)
    tw = jnp.stack([sa[i]["t_w"] for i in idx])            # (16, C, C)
    tb = jnp.stack([sa[i]["t_b"] for i in idx])
    gam = jnp.stack([sa[i]["gamma"] for i in idx])
    bet = jnp.stack([sa[i]["beta"] for i in idx])
    return kvw, vb, tw, tb, gam, bet


def point_transformer_last_forward(x, params):
    B, C, N = x.shape
    BN = B * N
    L = NUM_LAYERS

    # Fold batch onto the lane axis once, in the wrapper: (C, B*N).
    x_flat = jnp.transpose(x, (1, 0, 2)).reshape(C, BN)
    kvw, vb, tw, tb, gam, bet = _pack_sa_params(params["sa"])

    res = lambda i: (0, 0)            # resident (constant-block) inputs
    per_layer = lambda i: (i, 0, 0)   # streamed / prefetched per grid step

    grid_spec = pltpu.PrefetchScalarGridSpec(
        num_scalar_prefetch=0,
        grid=(L,),
        in_specs=[
            pl.BlockSpec((C, BN), res),                   # x_flat
            pl.BlockSpec((C, C), res),                    # conv1 weight
            pl.BlockSpec((C, 1), res),                    # bn1 gamma
            pl.BlockSpec((C, 1), res),                    # bn1 beta
            pl.BlockSpec((C, C), res),                    # conv2 weight
            pl.BlockSpec((C, 1), res),                    # bn2 gamma
            pl.BlockSpec((C, 1), res),                    # bn2 beta
            pl.BlockSpec((1, C + C // 4, C), per_layer),  # stacked qk + v weight
            pl.BlockSpec((1, C, 1), per_layer),           # v bias
            pl.BlockSpec((1, C, C), per_layer),           # trans_conv weight
            pl.BlockSpec((1, C, 1), per_layer),           # trans_conv bias
            pl.BlockSpec((1, C, 1), per_layer),           # after_norm gamma
            pl.BlockSpec((1, C, 1), per_layer),           # after_norm beta
        ],
        out_specs=pl.BlockSpec((1, C, BN), per_layer),
        scratch_shapes=[pltpu.VMEM((C, BN), jnp.float32)],  # resident activation
    )

    out = pl.pallas_call(
        _make_pct_kernel(B, N, C),
        grid_spec=grid_spec,
        out_shape=jax.ShapeDtypeStruct((L, C, BN), jnp.float32),
        compiler_params=pltpu.CompilerParams(
            # The layer axis is a true sequential dependency (activation carry
            # + cross-batch BatchNorm statistics) -> must stay "arbitrary".
            dimension_semantics=("arbitrary",),
            vmem_limit_bytes=32 * 1024 * 1024,
        ),
    )(x_flat, params["conv1_w"], params["bn1_g"], params["bn1_b"],
      params["conv2_w"], params["bn2_g"], params["bn2_b"],
      kvw, vb, tw, tb, gam, bet)

    # Layout plumbing back to the PyTorch (B, 16*C, N) concat layout.
    out = out.reshape(L, C, B, N)
    out = jnp.transpose(out, (2, 0, 1, 3)).reshape(B, L * C, N)
    return out


# ----------------------------------------------------------------------------
# Deterministic synthetic parameters (BN affine = identity, like fresh PyTorch)
# ----------------------------------------------------------------------------
def init_params(key, C):
    def w(k, shape, scale):
        return scale * jax.random.normal(k, shape, jnp.float32)

    keys = iter(jax.random.split(key, 2 + 12 * 5))
    s = 1.0 / float(C) ** 0.5
    params = {
        "conv1_w": w(next(keys), (C, C), s),
        "conv2_w": w(next(keys), (C, C), s),
        "bn1_g": jnp.ones((C, 1), jnp.float32), "bn1_b": jnp.zeros((C, 1), jnp.float32),
        "bn2_g": jnp.ones((C, 1), jnp.float32), "bn2_b": jnp.zeros((C, 1), jnp.float32),
        "sa": [],
    }
    for _ in range(12):
        params["sa"].append({
            # modest scales keep the attention logits well conditioned so the
            # numerical comparison below is meaningful (tight) and stable.
            "qk_w": w(next(keys), (C // 4, C), 0.02),
            "v_w":  w(next(keys), (C, C), 0.04),
            "v_b":  w(next(keys), (C, 1), 0.05),
            "t_w":  w(next(keys), (C, C), s),
            "t_b":  w(next(keys), (C, 1), 0.05),
            "gamma": jnp.ones((C, 1), jnp.float32),
            "beta":  jnp.zeros((C, 1), jnp.float32),
        })
    return params


# ----------------------------------------------------------------------------
# Pure-JAX reference (same math, HIGHEST precision) for a correctness check
# ----------------------------------------------------------------------------
HI = jax.lax.Precision.HIGHEST


def _ref_conv_bn_relu(x, w, g, b):
    y = jnp.einsum("oc,bcn->bon", w, x, precision=HI)
    mean = jnp.mean(y, axis=(0, 2), keepdims=True)
    var = jnp.mean((y - mean) ** 2, axis=(0, 2), keepdims=True)
    return jnp.maximum((y - mean) * jax.lax.rsqrt(var + EPS_BN) * g[None] + b[None], 0.0)


def _ref_sa(x, p):
    x_k = jnp.einsum("dc,bcn->bdn", p["qk_w"], x, precision=HI)
    energy = jnp.einsum("bdn,bdm->bnm", x_k, x_k, precision=HI)
    m = jnp.max(energy, axis=-1, keepdims=True)
    e = jnp.exp(energy - m)
    att = e / jnp.sum(e, axis=-1, keepdims=True)
    att = att / (1e-9 + jnp.sum(att, axis=1, keepdims=True))
    x_v = jnp.einsum("oc,bcn->bon", p["v_w"], x, precision=HI) + p["v_b"][None]
    x_r = jnp.einsum("bcn,bnm->bcm", x_v, att, precision=HI)
    t = jnp.einsum("oc,bcn->bon", p["t_w"], x - x_r, precision=HI) + p["t_b"][None]
    mean = jnp.mean(t, axis=(0, 2), keepdims=True)
    var = jnp.mean((t - mean) ** 2, axis=(0, 2), keepdims=True)
    y = jnp.maximum((t - mean) * jax.lax.rsqrt(var + EPS_BN) * p["gamma"][None]
                    + p["beta"][None], 0.0)
    return x + y


def _ref_forward(x, params):
    x = _ref_conv_bn_relu(x, params["conv1_w"], params["bn1_g"], params["bn1_b"])
    x = _ref_conv_bn_relu(x, params["conv2_w"], params["bn2_g"], params["bn2_b"])
    outs, cur = [], x
    for i in range(12):
        cur = _ref_sa(cur, params["sa"][i]); outs.append(cur)
    for _ in range(4):
        cur = _ref_sa(cur, params["sa"][11]); outs.append(cur)
    return jnp.concatenate(outs, axis=1)


# ----------------------------------------------------------------------------
if __name__ == "__main__":
    B, C, N = 2, 64, 32   # small shapes; C=64 matches the module default
    key = jax.random.PRNGKey(0)
    kx, kp = jax.random.split(key)
    x = jax.random.normal(kx, (B, C, N), jnp.float32)
    params = init_params(kp, C)

    fwd = jax.jit(point_transformer_last_forward)
    out = jax.block_until_ready(fwd(x, params))

    assert out.shape == (B, 16 * C, N), out.shape
    ref = _ref_forward(x, params)
    err = float(jnp.max(jnp.abs(out - ref)))
    assert err < 5e-2, f"max abs error vs reference: {err}"
    print("KERNEL_OK")
</pallas_src>

<mosaic_0001>
module attributes {stable_mosaic.version = 11 : i64} {
  func.func @kernel(%arg0: i32, %arg1: memref<64x64xf32, #tpu.memory_space<vmem>>, %arg2: memref<64x64xf32, #tpu.memory_space<vmem>>, %arg3: memref<64x1xf32, #tpu.memory_space<vmem>>, %arg4: memref<64x1xf32, #tpu.memory_space<vmem>>, %arg5: memref<64x64xf32, #tpu.memory_space<vmem>>, %arg6: memref<64x1xf32, #tpu.memory_space<vmem>>, %arg7: memref<64x1xf32, #tpu.memory_space<vmem>>, %arg8: memref<1x80x64xf32, #tpu.memory_space<vmem>>, %arg9: memref<1x64x1xf32, #tpu.memory_space<vmem>>, %arg10: memref<1x64x64xf32, #tpu.memory_space<vmem>>, %arg11: memref<1x64x1xf32, #tpu.memory_space<vmem>>, %arg12: memref<1x64x1xf32, #tpu.memory_space<vmem>>, %arg13: memref<1x64x1xf32, #tpu.memory_space<vmem>>, %arg14: memref<1x64x64xf32, #tpu.memory_space<vmem>>, %arg15: memref<64x64xf32, #tpu.memory_space<vmem>>) attributes {dimension_semantics = [#tpu.dimension_semantics<arbitrary>], iteration_bounds = array<i64: 16>, scalar_prefetch = 0 : i64, scratch_operands = 1 : i64, tpu.core_type = #tpu.core_type<tc>, window_params = [{pipeline_mode = #tpu.pipeline_mode<synchronous>, transform_indices = @transform_0, window_bounds = array<i64: 64, 64>}, {pipeline_mode = #tpu.pipeline_mode<synchronous>, transform_indices = @transform_1, window_bounds = array<i64: 64, 64>}, {pipeline_mode = #tpu.pipeline_mode<synchronous>, transform_indices = @transform_2, window_bounds = array<i64: 64, 1>}, {pipeline_mode = #tpu.pipeline_mode<synchronous>, transform_indices = @transform_3, window_bounds = array<i64: 64, 1>}, {pipeline_mode = #tpu.pipeline_mode<synchronous>, transform_indices = @transform_4, window_bounds = array<i64: 64, 64>}, {pipeline_mode = #tpu.pipeline_mode<synchronous>, transform_indices = @transform_5, window_bounds = array<i64: 64, 1>}, {pipeline_mode = #tpu.pipeline_mode<synchronous>, transform_indices = @transform_6, window_bounds = array<i64: 64, 1>}, {transform_indices = @transform_7, window_bounds = array<i64: 1, 80, 64>}, {transform_indices = @transform_8, window_bounds = array<i64: 1, 64, 1>}, {transform_indices = @transform_9, window_bounds = array<i64: 1, 64, 64>}, {transform_indices = @transform_10, window_bounds = array<i64: 1, 64, 1>}, {transform_indices = @transform_11, window_bounds = array<i64: 1, 64, 1>}, {transform_indices = @transform_12, window_bounds = array<i64: 1, 64, 1>}, {transform_indices = @transform_13, window_bounds = array<i64: 1, 64, 64>}]} {
    %c0_i32 = arith.constant 0 : i32
    %0 = arith.cmpi eq, %arg0, %c0_i32 : i32
    %1 = arith.extui %0 : i1 to i32
    %c0_i32_0 = arith.constant 0 : i32
    %2 = arith.cmpi ne, %1, %c0_i32_0 : i32
    scf.if %2 {
      %c0_44 = arith.constant 0 : index
      %c0_45 = arith.constant 0 : index
      %96 = vector.load %arg2[%c0_44, %c0_45] : memref<64x64xf32, #tpu.memory_space<vmem>>, vector<64x64xf32>
      %c0_46 = arith.constant 0 : index
      %c0_47 = arith.constant 0 : index
      %97 = vector.load %arg1[%c0_46, %c0_47] : memref<64x64xf32, #tpu.memory_space<vmem>>, vector<64x64xf32>
      %cst_48 = arith.constant dense<0.000000e+00> : vector<64x64xf32>
      %98 = tpu.matmul %96, %97, %cst_48 {dimension_numbers = #tpu.dot_dimension_numbers<[1], [0], [0], [1], [0, 0, 1, 1], [], []>} : vector<64x64xf32>, vector<64x64xf32>, vector<64x64xf32> -> vector<64x64xf32>
      %c0_49 = arith.constant 0 : index
      %c0_50 = arith.constant 0 : index
      %99 = vector.load %arg3[%c0_49, %c0_50] : memref<64x1xf32, #tpu.memory_space<vmem>>, vector<64x1xf32>
      %c0_51 = arith.constant 0 : index
      %c0_52 = arith.constant 0 : index
      %100 = vector.load %arg4[%c0_51, %c0_52] : memref<64x1xf32, #tpu.memory_space<vmem>>, vector<64x1xf32>
      %cst_53 = arith.constant dense<0.000000e+00> : vector<64xf32>
      %101 = vector.multi_reduction <add>, %98, %cst_53 [1] : vector<64x64xf32> to vector<64xf32>
      %102 = vector.shape_cast %101 : vector<64xf32> to vector<64x1xf32>
      %103 = arith.mulf %98, %98 : vector<64x64xf32>
      %cst_54 = arith.constant dense<0.000000e+00> : vector<64xf32>
      %104 = vector.multi_reduction <add>, %103, %cst_54 [1] : vector<64x64xf32> to vector<64xf32>
      %105 = vector.shape_cast %104 : vector<64xf32> to vector<64x1xf32>
      %cst_55 = arith.constant 1.562500e-02 : f32
      %106 = vector.broadcast %cst_55 : f32 to vector<64x1xf32>
      %107 = arith.mulf %102, %106 : vector<64x1xf32>
      %cst_56 = arith.constant 1.562500e-02 : f32
      %108 = vector.broadcast %cst_56 : f32 to vector<64x1xf32>
      %109 = arith.mulf %105, %108 : vector<64x1xf32>
      %110 = arith.mulf %107, %107 : vector<64x1xf32>
      %111 = arith.subf %109, %110 : vector<64x1xf32>
      %cst_57 = arith.constant 9.99999974E-6 : f32
      %112 = vector.broadcast %cst_57 : f32 to vector<64x1xf32>
      %113 = arith.addf %111, %112 : vector<64x1xf32>
      %114 = math.rsqrt %113 : vector<64x1xf32>
      %115 = arith.mulf %114, %99 : vector<64x1xf32>
      %116 = vector.broadcast %107 : vector<64x1xf32> to vector<64x64xf32>
      %117 = arith.subf %98, %116 : vector<64x64xf32>
      %118 = vector.broadcast %115 : vector<64x1xf32> to vector<64x64xf32>
      %119 = arith.mulf %117, %118 : vector<64x64xf32>
      %120 = vector.broadcast %100 : vector<64x1xf32> to vector<64x64xf32>
      %121 = arith.addf %119, %120 : vector<64x64xf32>
      %cst_58 = arith.constant 0.000000e+00 : f32
      %122 = vector.broadcast %cst_58 : f32 to vector<64x64xf32>
      %123 = arith.maximumf %121, %122 : vector<64x64xf32>
      %c0_59 = arith.constant 0 : index
      %c0_60 = arith.constant 0 : index
      %124 = vector.load %arg5[%c0_59, %c0_60] : memref<64x64xf32, #tpu.memory_space<vmem>>, vector<64x64xf32>
      %cst_61 = arith.constant dense<0.000000e+00> : vector<64x64xf32>
      %125 = tpu.matmul %124, %123, %cst_61 {dimension_numbers = #tpu.dot_dimension_numbers<[1], [0], [0], [1], [0, 0, 1, 1], [], []>} : vector<64x64xf32>, vector<64x64xf32>, vector<64x64xf32> -> vector<64x64xf32>
      %c0_62 = arith.constant 0 : index
      %c0_63 = arith.constant 0 : index
      %126 = vector.load %arg6[%c0_62, %c0_63] : memref<64x1xf32, #tpu.memory_space<vmem>>, vector<64x1xf32>
      %c0_64 = arith.constant 0 : index
      %c0_65 = arith.constant 0 : index
      %127 = vector.load %arg7[%c0_64, %c0_65] : memref<64x1xf32, #tpu.memory_space<vmem>>, vector<64x1xf32>
      %cst_66 = arith.constant dense<0.000000e+00> : vector<64xf32>
      %128 = vector.multi_reduction <add>, %125, %cst_66 [1] : vector<64x64xf32> to vector<64xf32>
      %129 = vector.shape_cast %128 : vector<64xf32> to vector<64x1xf32>
      %130 = arith.mulf %125, %125 : vector<64x64xf32>
      %cst_67 = arith.constant dense<0.000000e+00> : vector<64xf32>
      %131 = vector.multi_reduction <add>, %130, %cst_67 [1] : vector<64x64xf32> to vector<64xf32>
      %132 = vector.shape_cast %131 : vector<64xf32> to vector<64x1xf32>
      %cst_68 = arith.constant 1.562500e-02 : f32
      %133 = vector.broadcast %cst_68 : f32 to vector<64x1xf32>
      %134 = arith.mulf %129, %133 : vector<64x1xf32>
      %cst_69 = arith.constant 1.562500e-02 : f32
      %135 = vector.broadcast %cst_69 : f32 to vector<64x1xf32>
      %136 = arith.mulf %132, %135 : vector<64x1xf32>
      %137 = arith.mulf %134, %134 : vector<64x1xf32>
      %138 = arith.subf %136, %137 : vector<64x1xf32>
      %cst_70 = arith.constant 9.99999974E-6 : f32
      %139 = vector.broadcast %cst_70 : f32 to vector<64x1xf32>
      %140 = arith.addf %138, %139 : vector<64x1xf32>
      %141 = math.rsqrt %140 : vector<64x1xf32>
      %142 = arith.mulf %141, %126 : vector<64x1xf32>
      %143 = vector.broadcast %134 : vector<64x1xf32> to vector<64x64xf32>
      %144 = arith.subf %125, %143 : vector<64x64xf32>
      %145 = vector.broadcast %142 : vector<64x1xf32> to vector<64x64xf32>
      %146 = arith.mulf %144, %145 : vector<64x64xf32>
      %147 = vector.broadcast %127 : vector<64x1xf32> to vector<64x64xf32>
      %148 = arith.addf %146, %147 : vector<64x64xf32>
      %cst_71 = arith.constant 0.000000e+00 : f32
      %149 = vector.broadcast %cst_71 : f32 to vector<64x64xf32>
      %150 = arith.maximumf %148, %149 : vector<64x64xf32>
      %c0_72 = arith.constant 0 : index
      %c0_73 = arith.constant 0 : index
      %151 = vector.load %arg15[%c0_72, %c0_73] : memref<64x64xf32, #tpu.memory_space<vmem>>, vector<64x64xf32>
      tpu.vector_store %arg15[%c0_72, %c0_73], %150 {strides = array<i32>} : memref<64x64xf32, #tpu.memory_space<vmem>>, vector<64x64xf32>,
    } else {
    }
    %c0 = arith.constant 0 : index
    %c0_1 = arith.constant 0 : index
    %3 = vector.load %arg15[%c0, %c0_1] : memref<64x64xf32, #tpu.memory_space<vmem>>, vector<64x64xf32>
    %c0_2 = arith.constant 0 : index
    %c0_3 = arith.constant 0 : index
    %c0_4 = arith.constant 0 : index
    %4 = vector.load %arg8[%c0_2, %c0_3, %c0_4] : memref<1x80x64xf32, #tpu.memory_space<vmem>>, vector<1x80x64xf32>
    %5 = vector.shape_cast %4 : vector<1x80x64xf32> to vector<80x64xf32>
    %c0_5 = arith.constant 0 : index
    %c0_6 = arith.constant 0 : index
    %c0_7 = arith.constant 0 : index
    %6 = vector.load %arg9[%c0_5, %c0_6, %c0_7] : memref<1x64x1xf32, #tpu.memory_space<vmem>>, vector<1x64x1xf32>
    %7 = vector.shape_cast %6 : vector<1x64x1xf32> to vector<64x1xf32>
    %c0_8 = arith.constant 0 : index
    %c0_9 = arith.constant 0 : index
    %c0_10 = arith.constant 0 : index
    %8 = vector.load %arg10[%c0_8, %c0_9, %c0_10] : memref<1x64x64xf32, #tpu.memory_space<vmem>>, vector<1x64x64xf32>
    %9 = vector.shape_cast %8 : vector<1x64x64xf32> to vector<64x64xf32>
    %c0_11 = arith.constant 0 : index
    %c0_12 = arith.constant 0 : index
    %c0_13 = arith.constant 0 : index
    %10 = vector.load %arg11[%c0_11, %c0_12, %c0_13] : memref<1x64x1xf32, #tpu.memory_space<vmem>>, vector<1x64x1xf32>
    %11 = vector.shape_cast %10 : vector<1x64x1xf32> to vector<64x1xf32>
    %c0_14 = arith.constant 0 : index
    %c0_15 = arith.constant 0 : index
    %c0_16 = arith.constant 0 : index
    %12 = vector.load %arg12[%c0_14, %c0_15, %c0_16] : memref<1x64x1xf32, #tpu.memory_space<vmem>>, vector<1x64x1xf32>
    %13 = vector.shape_cast %12 : vector<1x64x1xf32> to vector<64x1xf32>
    %c0_17 = arith.constant 0 : index
    %c0_18 = arith.constant 0 : index
    %c0_19 = arith.constant 0 : index
    %14 = vector.load %arg13[%c0_17, %c0_18, %c0_19] : memref<1x64x1xf32, #tpu.memory_space<vmem>>, vector<1x64x1xf32>
    %15 = vector.shape_cast %14 : vector<1x64x1xf32> to vector<64x1xf32>
    %cst = arith.constant dense<0.000000e+00> : vector<80x64xf32>
    %16 = tpu.matmul %5, %3, %cst {dimension_numbers = #tpu.dot_dimension_numbers<[1], [0], [0], [1], [0, 0, 1, 1], [], []>} : vector<80x64xf32>, vector<64x64xf32>, vector<80x64xf32> -> vector<80x64xf32>
    %17 = vector.extract_strided_slice %16 {offsets = [0, 0], sizes = [16, 64], strides = [1, 1]} : vector<80x64xf32> to vector<16x64xf32>
    %18 = vector.extract_strided_slice %16 {offsets = [16, 0], sizes = [64, 64], strides = [1, 1]} : vector<80x64xf32> to vector<64x64xf32>
    %19 = vector.broadcast %7 : vector<64x1xf32> to vector<64x64xf32>
    %20 = arith.addf %18, %19 : vector<64x64xf32>
    %21 = vector.extract_strided_slice %17 {offsets = [0, 0], sizes = [16, 32], strides = [1, 1]} : vector<16x64xf32> to vector<16x32xf32>
    %22 = vector.extract_strided_slice %20 {offsets = [0, 0], sizes = [64, 32], strides = [1, 1]} : vector<64x64xf32> to vector<64x32xf32>
    %cst_20 = arith.constant dense<0.000000e+00> : vector<32x32xf32>
    %23 = tpu.matmul %21, %21, %cst_20 {dimension_numbers = #tpu.dot_dimension_numbers<[0], [0], [1], [1], [0, 1, 1, 1], [], []>} : vector<16x32xf32>, vector<16x32xf32>, vector<32x32xf32> -> vector<32x32xf32>
    %cst_21 = arith.constant dense<0xFF800000> : vector<32xf32>
    %24 = vector.multi_reduction <maximumf>, %23, %cst_21 [1] : vector<32x32xf32> to vector<32xf32>
    %25 = vector.shape_cast %24 : vector<32xf32> to vector<32x1xf32>
    %26 = vector.broadcast %25 : vector<32x1xf32> to vector<32x32xf32>
    %27 = arith.subf %23, %26 : vector<32x32xf32>
    %28 = math.exp %27 : vector<32x32xf32>
    %cst_22 = arith.constant dense<0.000000e+00> : vector<32xf32>
    %29 = vector.multi_reduction <add>, %28, %cst_22 [1] : vector<32x32xf32> to vector<32xf32>
    %30 = vector.shape_cast %29 : vector<32xf32> to vector<32x1xf32>
    %31 = tpu.reciprocal %30 {approx = true} : vector<32x1xf32> -> vector<32x1xf32>
    %32 = vector.broadcast %31 : vector<32x1xf32> to vector<32x32xf32>
    %33 = arith.mulf %28, %32 : vector<32x32xf32>
    %cst_23 = arith.constant dense<0.000000e+00> : vector<32xf32>
    %34 = vector.multi_reduction <add>, %33, %cst_23 [0] : vector<32x32xf32> to vector<32xf32>
    %35 = vector.shape_cast %34 : vector<32xf32> to vector<1x32xf32>
    %cst_24 = arith.constant 9.99999971E-10 : f32
    %36 = vector.broadcast %cst_24 : f32 to vector<1x32xf32>
    %37 = arith.addf %36, %35 : vector<1x32xf32>
    %38 = tpu.reciprocal %37 {approx = true} : vector<1x32xf32> -> vector<1x32xf32>
    %39 = vector.broadcast %38 : vector<1x32xf32> to vector<32x32xf32>
    %40 = arith.mulf %33, %39 : vector<32x32xf32>
    %cst_25 = arith.constant dense<0.000000e+00> : vector<64x32xf32>
    %41 = tpu.matmul %22, %40, %cst_25 {dimension_numbers = #tpu.dot_dimension_numbers<[1], [0], [0], [1], [0, 0, 1, 1], [], []>} : vector<64x32xf32>, vector<32x32xf32>, vector<64x32xf32> -> vector<64x32xf32>
    %42 = vector.extract_strided_slice %17 {offsets = [0, 32], sizes = [16, 32], strides = [1, 1]} : vector<16x64xf32> to vector<16x32xf32>
    %43 = vector.extract_strided_slice %20 {offsets = [0, 32], sizes = [64, 32], strides = [1, 1]} : vector<64x64xf32> to vector<64x32xf32>
    %cst_26 = arith.constant dense<0.000000e+00> : vector<32x32xf32>
    %44 = tpu.matmul %42, %42, %cst_26 {dimension_numbers = #tpu.dot_dimension_numbers<[0], [0], [1], [1], [0, 1, 1, 1], [], []>} : vector<16x32xf32>, vector<16x32xf32>, vector<32x32xf32> -> vector<32x32xf32>
    %cst_27 = arith.constant dense<0xFF800000> : vector<32xf32>
    %45 = vector.multi_reduction <maximumf>, %44, %cst_27 [1] : vector<32x32xf32> to vector<32xf32>
    %46 = vector.shape_cast %45 : vector<32xf32> to vector<32x1xf32>
    %47 = vector.broadcast %46 : vector<32x1xf32> to vector<32x32xf32>
    %48 = arith.subf %44, %47 : vector<32x32xf32>
    %49 = math.exp %48 : vector<32x32xf32>
    %cst_28 = arith.constant dense<0.000000e+00> : vector<32xf32>
    %50 = vector.multi_reduction <add>, %49, %cst_28 [1] : vector<32x32xf32> to vector<32xf32>
    %51 = vector.shape_cast %50 : vector<32xf32> to vector<32x1xf32>
    %52 = tpu.reciprocal %51 {approx = true} : vector<32x1xf32> -> vector<32x1xf32>
    %53 = vector.broadcast %52 : vector<32x1xf32> to vector<32x32xf32>
    %54 = arith.mulf %49, %53 : vector<32x32xf32>
    %cst_29 = arith.constant dense<0.000000e+00> : vector<32xf32>
    %55 = vector.multi_reduction <add>, %54, %cst_29 [0] : vector<32x32xf32> to vector<32xf32>
    %56 = vector.shape_cast %55 : vector<32xf32> to vector<1x32xf32>
    %cst_30 = arith.constant 9.99999971E-10 : f32
    %57 = vector.broadcast %cst_30 : f32 to vector<1x32xf32>
    %58 = arith.addf %57, %56 : vector<1x32xf32>
    %59 = tpu.reciprocal %58 {approx = true} : vector<1x32xf32> -> vector<1x32xf32>
    %60 = vector.broadcast %59 : vector<1x32xf32> to vector<32x32xf32>
    %61 = arith.mulf %54, %60 : vector<32x32xf32>
    %cst_31 = arith.constant dense<0.000000e+00> : vector<64x32xf32>
    %62 = tpu.matmul %43, %61, %cst_31 {dimension_numbers = #tpu.dot_dimension_numbers<[1], [0], [0], [1], [0, 0, 1, 1], [], []>} : vector<64x32xf32>, vector<32x32xf32>, vector<64x32xf32> -> vector<64x32xf32>
    %63 = tpu.concatenate %41, %62 in 1 : vector<64x32xf32>, vector<64x32xf32> -> vector<64x64xf32>
    %64 = arith.subf %3, %63 : vector<64x64xf32>
    %cst_32 = arith.constant dense<0.000000e+00> : vector<64x64xf32>
    %65 = tpu.matmul %9, %64, %cst_32 {dimension_numbers = #tpu.dot_dimension_numbers<[1], [0], [0], [1], [0, 0, 1, 1], [], []>} : vector<64x64xf32>, vector<64x64xf32>, vector<64x64xf32> -> vector<64x64xf32>
    %66 = vector.broadcast %11 : vector<64x1xf32> to vector<64x64xf32>
    %67 = arith.addf %65, %66 : vector<64x64xf32>
    %cst_33 = arith.constant dense<0.000000e+00> : vector<64xf32>
    %68 = vector.multi_reduction <add>, %67, %cst_33 [1] : vector<64x64xf32> to vector<64xf32>
    %69 = vector.shape_cast %68 : vector<64xf32> to vector<64x1xf32>
    %70 = arith.mulf %67, %67 : vector<64x64xf32>
    %cst_34 = arith.constant dense<0.000000e+00> : vector<64xf32>
    %71 = vector.multi_reduction <add>, %70, %cst_34 [1] : vector<64x64xf32> to vector<64xf32>
    %72 = vector.shape_cast %71 : vector<64xf32> to vector<64x1xf32>
    %cst_35 = arith.constant 1.562500e-02 : f32
    %73 = vector.broadcast %cst_35 : f32 to vector<64x1xf32>
    %74 = arith.mulf %69, %73 : vector<64x1xf32>
    %cst_36 = arith.constant 1.562500e-02 : f32
    %75 = vector.broadcast %cst_36 : f32 to vector<64x1xf32>
    %76 = arith.mulf %72, %75 : vector<64x1xf32>
    %77 = arith.mulf %74, %74 : vector<64x1xf32>
    %78 = arith.subf %76, %77 : vector<64x1xf32>
    %cst_37 = arith.constant 9.99999974E-6 : f32
    %79 = vector.broadcast %cst_37 : f32 to vector<64x1xf32>
    %80 = arith.addf %78, %79 : vector<64x1xf32>
    %81 = math.rsqrt %80 : vector<64x1xf32>
    %82 = arith.mulf %81, %13 : vector<64x1xf32>
    %83 = vector.broadcast %74 : vector<64x1xf32> to vector<64x64xf32>
    %84 = arith.subf %67, %83 : vector<64x64xf32>
    %85 = vector.broadcast %82 : vector<64x1xf32> to vector<64x64xf32>
    %86 = arith.mulf %84, %85 : vector<64x64xf32>
    %87 = vector.broadcast %15 : vector<64x1xf32> to vector<64x64xf32>
    %88 = arith.addf %86, %87 : vector<64x64xf32>
    %cst_38 = arith.constant 0.000000e+00 : f32
    %89 = vector.broadcast %cst_38 : f32 to vector<64x64xf32>
    %90 = arith.maximumf %88, %89 : vector<64x64xf32>
    %91 = arith.addf %3, %90 : vector<64x64xf32>
    %c0_39 = arith.constant 0 : index
    %c0_40 = arith.constant 0 : index
    %92 = vector.load %arg15[%c0_39, %c0_40] : memref<64x64xf32, #tpu.memory_space<vmem>>, vector<64x64xf32>
    tpu.vector_store %arg15[%c0_39, %c0_40], %91 {strides = array<i32>} : memref<64x64xf32, #tpu.memory_space<vmem>>, vector<64x64xf32>,
    %c0_41 = arith.constant 0 : index
    %c0_42 = arith.constant 0 : index
    %c0_43 = arith.constant 0 : index
    %93 = vector.load %arg14[%c0_41, %c0_42, %c0_43] : memref<1x64x64xf32, #tpu.memory_space<vmem>>, vector<1x64x64xf32>
    %94 = vector.shape_cast %93 : vector<1x64x64xf32> to vector<64x64xf32>
    %95 = vector.shape_cast %91 : vector<64x64xf32> to vector<1x64x64xf32>
    tpu.vector_store %arg14[%c0_41, %c0_42, %c0_43], %95 {strides = array<i32>} : memref<1x64x64xf32, #tpu.memory_space<vmem>>, vector<1x64x64xf32>,
    return
  }
  func.func @transform_0(%arg0: i32) -> (i32, i32) {
    %c0_i32 = arith.constant 0 : i32
    %c0_i32_0 = arith.constant 0 : i32
    %c0_i32_1 = arith.constant 0 : i32
    return %c0_i32, %c0_i32_0 : i32, i32
  }
  func.func @transform_1(%arg0: i32) -> (i32, i32) {
    %c0_i32 = arith.constant 0 : i32
    %c0_i32_0 = arith.constant 0 : i32
    %c0_i32_1 = arith.constant 0 : i32
    return %c0_i32, %c0_i32_0 : i32, i32
  }
  func.func @transform_2(%arg0: i32) -> (i32, i32) {
    %c0_i32 = arith.constant 0 : i32
    %c0_i32_0 = arith.constant 0 : i32
    %c0_i32_1 = arith.constant 0 : i32
    return %c0_i32, %c0_i32_0 : i32, i32
  }
  func.func @transform_3(%arg0: i32) -> (i32, i32) {
    %c0_i32 = arith.constant 0 : i32
    %c0_i32_0 = arith.constant 0 : i32
    %c0_i32_1 = arith.constant 0 : i32
    return %c0_i32, %c0_i32_0 : i32, i32
  }
  func.func @transform_4(%arg0: i32) -> (i32, i32) {
    %c0_i32 = arith.constant 0 : i32
    %c0_i32_0 = arith.constant 0 : i32
    %c0_i32_1 = arith.constant 0 : i32
    return %c0_i32, %c0_i32_0 : i32, i32
  }
  func.func @transform_5(%arg0: i32) -> (i32, i32) {
    %c0_i32 = arith.constant 0 : i32
    %c0_i32_0 = arith.constant 0 : i32
    %c0_i32_1 = arith.constant 0 : i32
    return %c0_i32, %c0_i32_0 : i32, i32
  }
  func.func @transform_6(%arg0: i32) -> (i32, i32) {
    %c0_i32 = arith.constant 0 : i32
    %c0_i32_0 = arith.constant 0 : i32
    %c0_i32_1 = arith.constant 0 : i32
    return %c0_i32, %c0_i32_0 : i32, i32
  }
  func.func @transform_7(%arg0: i32) -> (i32, i32, i32) {
    %c0_i32 = arith.constant 0 : i32
    %c0_i32_0 = arith.constant 0 : i32
    %c0_i32_1 = arith.constant 0 : i32
    return %arg0, %c0_i32, %c0_i32_0 : i32, i32, i32
  }
  func.func @transform_8(%arg0: i32) -> (i32, i32, i32) {
    %c0_i32 = arith.constant 0 : i32
    %c0_i32_0 = arith.constant 0 : i32
    %c0_i32_1 = arith.constant 0 : i32
    return %arg0, %c0_i32, %c0_i32_0 : i32, i32, i32
  }
  func.func @transform_9(%arg0: i32) -> (i32, i32, i32) {
    %c0_i32 = arith.constant 0 : i32
    %c0_i32_0 = arith.constant 0 : i32
    %c0_i32_1 = arith.constant 0 : i32
    return %arg0, %c0_i32, %c0_i32_0 : i32, i32, i32
  }
  func.func @transform_10(%arg0: i32) -> (i32, i32, i32) {
    %c0_i32 = arith.constant 0 : i32
    %c0_i32_0 = arith.constant 0 : i32
    %c0_i32_1 = arith.constant 0 : i32
    return %arg0, %c0_i32, %c0_i32_0 : i32, i32, i32
  }
  func.func @transform_11(%arg0: i32) -> (i32, i32, i32) {
    %c0_i32 = arith.constant 0 : i32
    %c0_i32_0 = arith.constant 0 : i32
    %c0_i32_1 = arith.constant 0 : i32
    return %arg0, %c0_i32, %c0_i32_0 : i32, i32, i32
  }
  func.func @transform_12(%arg0: i32) -> (i32, i32, i32) {
    %c0_i32 = arith.constant 0 : i32
    %c0_i32_0 = arith.constant 0 : i32
    %c0_i32_1 = arith.constant 0 : i32
    return %arg0, %c0_i32, %c0_i32_0 : i32, i32, i32
  }
  func.func @transform_13(%arg0: i32) -> (i32, i32, i32) {
    %c0_i32 = arith.constant 0 : i32
    %c0_i32_0 = arith.constant 0 : i32
    %c0_i32_1 = arith.constant 0 : i32
    return %arg0, %c0_i32, %c0_i32_0 : i32, i32, i32
  }
}

</mosaic_0001>

<llo_original>
// kernel: point_transformer_last_forward.1
$region0: #{point_transformer_last_forward.1}
  #allocation0 [shape = 'u32[]', space=smem, size = 0x4, offset = 0x4, fixed_abs, tag = 'smem constant byte address 0x4 - core index']
  #allocation1 [shape = 'u32[144,128]{1,0:T(1,128)}', space=vmem, size = 0x12000, scoped, tag = 'internal scratch']
  #allocation2 [shape = 'f32[64,64]{1,0:T(8,128)}', space=vmem, size = 0x8000, scoped, tag = 'scratch operand']
  %s0 = inlined_call_operand.vmem [shape: f32[64,64], index: 0, kind: input, shape index: {}]
  %s1 = inlined_call_operand.vmem [shape: f32[64,64], index: 1, kind: input, shape index: {}]
  %s2 = inlined_call_operand.vmem [shape: f32[64,1], index: 2, kind: input, shape index: {}]
  %s3 = inlined_call_operand.vmem [shape: f32[64,1], index: 3, kind: input, shape index: {}]
  %s4 = inlined_call_operand.vmem [shape: f32[64,64], index: 4, kind: input, shape index: {}]
  %s5 = inlined_call_operand.vmem [shape: f32[64,1], index: 5, kind: input, shape index: {}]
  %s6 = inlined_call_operand.vmem [shape: f32[64,1], index: 6, kind: input, shape index: {}]
  %s7 = inlined_call_operand.vmem [shape: f32[16,80,64], index: 7, kind: input, shape index: {}]
  %s8 = inlined_call_operand.vmem [shape: f32[16,64,1], index: 8, kind: input, shape index: {}]
  %s9 = inlined_call_operand.vmem [shape: f32[16,64,64], index: 9, kind: input, shape index: {}]
  %s10 = inlined_call_operand.vmem [shape: f32[16,64,1], index: 10, kind: input, shape index: {}]
  %s11 = inlined_call_operand.vmem [shape: f32[16,64,1], index: 11, kind: input, shape index: {}]
  %s12 = inlined_call_operand.vmem [shape: f32[16,64,1], index: 12, kind: input, shape index: {}]
  %s13 = inlined_call_operand.vmem [shape: f32[16,64,64], index: 13, kind: output, shape index: {}]
  %s14 = sld [smem:[#allocation0]]
  $region89: #{point_transformer_last_forward.1} parent=0
    _
  %s16 = ssub.s32 1, %s14
  %s17 = scalar_select 0, %s16, %s14
  loop: start=0, step=1, limit=18
  $region2: #{point_transformer_last_forward.1} parent=0 // loop_pre_header
    _
  $region3: #{point_transformer_last_forward.1} parent=0 // loop_header
    %s19 = sphi 0, %s23
    %p20 = scmp.ge.s32.totalorder %s19, 18
    %s27 = sphi 0, %s27
    %s29 = sphi 0, %s27
    %s30 = sphi 0, %s29
    %s44 = sphi 0, %s30
    %s48 = sphi 0, %s48
    %s50 = sphi 0, %s48
    %s51 = sphi 0, %s50
    %s65 = sphi 0, %s51
    %s69 = sphi 0, %s69
    %s71 = sphi 0, %s69
    %s72 = sphi 0, %s71
    %s86 = sphi 0, %s72
    %s90 = sphi 0, %s90
    %s92 = sphi 0, %s90
    %s93 = sphi 0, %s92
    %s107 = sphi 0, %s93
    %s111 = sphi 0, %s111
    %s113 = sphi 0, %s111
    %s114 = sphi 0, %s113
    %s128 = sphi 0, %s114
    %s132 = sphi 0, %s132
    %s134 = sphi 0, %s132
    %s135 = sphi 0, %s134
    %s149 = sphi 0, %s135
    %s153 = sphi 0, %s153
    %s155 = sphi 0, %s153
    %s156 = sphi 0, %s155
    %s170 = sphi 0, %s156
    %s176 = sphi 0, %s178
    %s179 = sphi 0, %s176
    %s180 = sphi 0, %s179
    %s196 = sphi 0, %s180
    %s202 = sphi 0, %s204
    %s205 = sphi 0, %s202
    %s206 = sphi 0, %s205
    %s222 = sphi 0, %s206
    %s228 = sphi 0, %s230
    %s231 = sphi 0, %s228
    %s232 = sphi 0, %s231
    %s248 = sphi 0, %s232
    %s254 = sphi 0, %s256
    %s257 = sphi 0, %s254
    %s258 = sphi 0, %s257
    %s274 = sphi 0, %s258
    %s280 = sphi 0, %s282
    %s283 = sphi 0, %s280
    %s284 = sphi 0, %s283
    %s300 = sphi 0, %s284
    %s306 = sphi 0, %s308
    %s309 = sphi 0, %s306
    %s310 = sphi 0, %s309
    %s326 = sphi 0, %s310
    %s332 = sphi 0, %s334
    %s335 = sphi 0, %s332
    %s336 = sphi 0, %s335
    %s352 = sphi 0, %s336
  $region4: #{point_transformer_last_forward.1} parent=0 // loop_header_branch
    %22 = sbr.rel (%p20) target = $region8
  $region5: #{point_transformer_last_forward.1} parent=0 // loop_body
    %s24 = ssub.s32 %s19, 1
    %s25 = ssub.s32 %s19, 2
    %s26 = sadd.s32 %s19, 1
    %s28 = sadd.s32 %s27, 1
    %p31 = scmp.eq.s32.totalorder %s19, 15
    %p32 = scmp.ne.s32.totalorder %s27, %s29
    %p33 = scmp.eq.s32.totalorder %s19, 0
    %p34 = por %p32, %p33
    %p35 = scmp.ne.s32.totalorder %s27, %s29
    %p36 = scmp.eq.s32.totalorder %s24, 15
    %p37 = por %p35, %p36
    %p38 = scmp.ne.s32.totalorder %s29, %s30
    %p39 = scmp.eq.s32.totalorder %s24, 0
    %p40 = por %p38, %p39
    %p41 = scmp.ne.s32.totalorder %s29, %s30
    %p42 = scmp.eq.s32.totalorder %s25, 15
    %p43 = por %p41, %p42
    %p45 = scmp.ne.s32.totalorder %s30, %s44
    %p46 = scmp.eq.s32.totalorder %s25, 0
    %p47 = por %p45, %p46
    %s49 = sadd.s32 %s48, 1
    %p52 = scmp.eq.s32.totalorder %s19, 15
    %p53 = scmp.ne.s32.totalorder %s48, %s50
    %p54 = scmp.eq.s32.totalorder %s19, 0
    %p55 = por %p53, %p54
    %p56 = scmp.ne.s32.totalorder %s48, %s50
    %p57 = scmp.eq.s32.totalorder %s24, 15
    %p58 = por %p56, %p57
    %p59 = scmp.ne.s32.totalorder %s50, %s51
    %p60 = scmp.eq.s32.totalorder %s24, 0
    %p61 = por %p59, %p60
    %p62 = scmp.ne.s32.totalorder %s50, %s51
    %p63 = scmp.eq.s32.totalorder %s25, 15
    %p64 = por %p62, %p63
    %p66 = scmp.ne.s32.totalorder %s51, %s65
    %p67 = scmp.eq.s32.totalorder %s25, 0
    %p68 = por %p66, %p67
    %s70 = sadd.s32 %s69, 1
    %p73 = scmp.eq.s32.totalorder %s19, 15
    %p74 = scmp.ne.s32.totalorder %s69, %s71
    %p75 = scmp.eq.s32.totalorder %s19, 0
    %p76 = por %p74, %p75
    %p77 = scmp.ne.s32.totalorder %s69, %s71
    %p78 = scmp.eq.s32.totalorder %s24, 15
    %p79 = por %p77, %p78
    %p80 = scmp.ne.s32.totalorder %s71, %s72
    %p81 = scmp.eq.s32.totalorder %s24, 0
    %p82 = por %p80, %p81
    %p83 = scmp.ne.s32.totalorder %s71, %s72
    %p84 = scmp.eq.s32.totalorder %s25, 15
    %p85 = por %p83, %p84
    %p87 = scmp.ne.s32.totalorder %s72, %s86
    %p88 = scmp.eq.s32.totalorder %s25, 0
    %p89 = por %p87, %p88
    %s91 = sadd.s32 %s90, 1
    %p94 = scmp.eq.s32.totalorder %s19, 15
    %p95 = scmp.ne.s32.totalorder %s90, %s92
    %p96 = scmp.eq.s32.totalorder %s19, 0
    %p97 = por %p95, %p96
    %p98 = scmp.ne.s32.totalorder %s90, %s92
    %p99 = scmp.eq.s32.totalorder %s24, 15
    %p100 = por %p98, %p99
    %p101 = scmp.ne.s32.totalorder %s92, %s93
    %p102 = scmp.eq.s32.totalorder %s24, 0
    %p103 = por %p101, %p102
    %p104 = scmp.ne.s32.totalorder %s92, %s93
    %p105 = scmp.eq.s32.totalorder %s25, 15
    %p106 = por %p104, %p105
    %p108 = scmp.ne.s32.totalorder %s93, %s107
    %p109 = scmp.eq.s32.totalorder %s25, 0
    %p110 = por %p108, %p109
    %s112 = sadd.s32 %s111, 1
    %p115 = scmp.eq.s32.totalorder %s19, 15
    %p116 = scmp.ne.s32.totalorder %s111, %s113
    %p117 = scmp.eq.s32.totalorder %s19, 0
    %p118 = por %p116, %p117
    %p119 = scmp.ne.s32.totalorder %s111, %s113
    %p120 = scmp.eq.s32.totalorder %s24, 15
    %p121 = por %p119, %p120
    %p122 = scmp.ne.s32.totalorder %s113, %s114
    %p123 = scmp.eq.s32.totalorder %s24, 0
    %p124 = por %p122, %p123
    %p125 = scmp.ne.s32.totalorder %s113, %s114
    %p126 = scmp.eq.s32.totalorder %s25, 15
    %p127 = por %p125, %p126
    %p129 = scmp.ne.s32.totalorder %s114, %s128
    %p130 = scmp.eq.s32.totalorder %s25, 0
    %p131 = por %p129, %p130
    %s133 = sadd.s32 %s132, 1
    %p136 = scmp.eq.s32.totalorder %s19, 15
    %p137 = scmp.ne.s32.totalorder %s132, %s134
    %p138 = scmp.eq.s32.totalorder %s19, 0
    %p139 = por %p137, %p138
    %p140 = scmp.ne.s32.totalorder %s132, %s134
    %p141 = scmp.eq.s32.totalorder %s24, 15
    %p142 = por %p140, %p141
    %p143 = scmp.ne.s32.totalorder %s134, %s135
    %p144 = scmp.eq.s32.totalorder %s24, 0
    %p145 = por %p143, %p144
    %p146 = scmp.ne.s32.totalorder %s134, %s135
    %p147 = scmp.eq.s32.totalorder %s25, 15
    %p148 = por %p146, %p147
    %p150 = scmp.ne.s32.totalorder %s135, %s149
    %p151 = scmp.eq.s32.totalorder %s25, 0
    %p152 = por %p150, %p151
    %s154 = sadd.s32 %s153, 1
    %p157 = scmp.eq.s32.totalorder %s19, 15
    %p158 = scmp.ne.s32.totalorder %s153, %s155
    %p159 = scmp.eq.s32.totalorder %s19, 0
    %p160 = por %p158, %p159
    %p161 = scmp.ne.s32.totalorder %s153, %s155
    %p162 = scmp.eq.s32.totalorder %s24, 15
    %p163 = por %p161, %p162
    %p164 = scmp.ne.s32.totalorder %s155, %s156
    %p165 = scmp.eq.s32.totalorder %s24, 0
    %p166 = por %p164, %p165
    %p167 = scmp.ne.s32.totalorder %s155, %s156
    %p168 = scmp.eq.s32.totalorder %s25, 15
    %p169 = por %p167, %p168
    %p171 = scmp.ne.s32.totalorder %s156, %s170
    %p172 = scmp.eq.s32.totalorder %s25, 0
    %p173 = por %p171, %p172
    %s174 = ssub.s32 %s19, %s26
    %p175 = scmp.eq.s32.totalorder %s174, 0
    %s177 = sadd.s32 %s176, 1
    %s178 = scalar_select %p175, %s176, %s177
    %p181 = pneg %p175
    %p182 = scmp.eq.s32.totalorder %s19, 15
    %p183 = por %p181, %p182
    %p184 = scmp.ne.s32.totalorder %s176, %s179
    %p185 = scmp.eq.s32.totalorder %s19, 0
    %p186 = por %p184, %p185
    %p187 = scmp.ne.s32.totalorder %s176, %s179
    %p188 = scmp.eq.s32.totalorder %s24, 15
    %p189 = por %p187, %p188
    %p190 = scmp.ne.s32.totalorder %s179, %s180
    %p191 = scmp.eq.s32.totalorder %s24, 0
    %p192 = por %p190, %p191
    %p193 = scmp.ne.s32.totalorder %s179, %s180
    %p194 = scmp.eq.s32.totalorder %s25, 15
    %p195 = por %p193, %p194
    %p197 = scmp.ne.s32.totalorder %s180, %s196
    %p198 = scmp.eq.s32.totalorder %s25, 0
    %p199 = por %p197, %p198
    %s200 = ssub.s32 %s19, %s26
    %p201 = scmp.eq.s32.totalorder %s200, 0
    %s203 = sadd.s32 %s202, 1
    %s204 = scalar_select %p201, %s202, %s203
    %p207 = pneg %p201
    %p208 = scmp.eq.s32.totalorder %s19, 15
    %p209 = por %p207, %p208
    %p210 = scmp.ne.s32.totalorder %s202, %s205
    %p211 = scmp.eq.s32.totalorder %s19, 0
    %p212 = por %p210, %p211
    %p213 = scmp.ne.s32.totalorder %s202, %s205
    %p214 = scmp.eq.s32.totalorder %s24, 15
    %p215 = por %p213, %p214
    %p216 = scmp.ne.s32.totalorder %s205, %s206
    %p217 = scmp.eq.s32.totalorder %s24, 0
    %p218 = por %p216, %p217
    %p219 = scmp.ne.s32.totalorder %s205, %s206
    %p220 = scmp.eq.s32.totalorder %s25, 15
    %p221 = por %p219, %p220
    %p223 = scmp.ne.s32.totalorder %s206, %s222
    %p224 = scmp.eq.s32.totalorder %s25, 0
    %p225 = por %p223, %p224
    %s226 = ssub.s32 %s19, %s26
    %p227 = scmp.eq.s32.totalorder %s226, 0
    %s229 = sadd.s32 %s228, 1
    %s230 = scalar_select %p227, %s228, %s229
    %p233 = pneg %p227
    %p234 = scmp.eq.s32.totalorder %s19, 15
    %p235 = por %p233, %p234
    %p236 = scmp.ne.s32.totalorder %s228, %s231
    %p237 = scmp.eq.s32.totalorder %s19, 0
    %p238 = por %p236, %p237
    %p239 = scmp.ne.s32.totalorder %s228, %s231
    %p240 = scmp.eq.s32.totalorder %s24, 15
    %p241 = por %p239, %p240
    %p242 = scmp.ne.s32.totalorder %s231, %s232
    %p243 = scmp.eq.s32.totalorder %s24, 0
    %p244 = por %p242, %p243
    %p245 = scmp.ne.s32.totalorder %s231, %s232
    %p246 = scmp.eq.s32.totalorder %s25, 15
    %p247 = por %p245, %p246
    %p249 = scmp.ne.s32.totalorder %s232, %s248
    %p250 = scmp.eq.s32.totalorder %s25, 0
    %p251 = por %p249, %p250
    %s252 = ssub.s32 %s19, %s26
    %p253 = scmp.eq.s32.totalorder %s252, 0
    %s255 = sadd.s32 %s254, 1
    %s256 = scalar_select %p253, %s254, %s255
    %p259 = pneg %p253
    %p260 = scmp.eq.s32.totalorder %s19, 15
    %p261 = por %p259, %p260
    %p262 = scmp.ne.s32.totalorder %s254, %s257
    %p263 = scmp.eq.s32.totalorder %s19, 0
    %p264 = por %p262, %p263
    %p265 = scmp.ne.s32.totalorder %s254, %s257
    %p266 = scmp.eq.s32.totalorder %s24, 15
    %p267 = por %p265, %p266
    %p268 = scmp.ne.s32.totalorder %s257, %s258
    %p269 = scmp.eq.s32.totalorder %s24, 0
    %p270 = por %p268, %p269
    %p271 = scmp.ne.s32.totalorder %s257, %s258
    %p272 = scmp.eq.s32.totalorder %s25, 15
    %p273 = por %p271, %p272
    %p275 = scmp.ne.s32.totalorder %s258, %s274
    %p276 = scmp.eq.s32.totalorder %s25, 0
    %p277 = por %p275, %p276
    %s278 = ssub.s32 %s19, %s26
    %p279 = scmp.eq.s32.totalorder %s278, 0
    %s281 = sadd.s32 %s280, 1
    %s282 = scalar_select %p279, %s280, %s281
    %p285 = pneg %p279
    %p286 = scmp.eq.s32.totalorder %s19, 15
    %p287 = por %p285, %p286
    %p288 = scmp.ne.s32.totalorder %s280, %s283
    %p289 = scmp.eq.s32.totalorder %s19, 0
    %p290 = por %p288, %p289
    %p291 = scmp.ne.s32.totalorder %s280, %s283
    %p292 = scmp.eq.s32.totalorder %s24, 15
    %p293 = por %p291, %p292
    %p294 = scmp.ne.s32.totalorder %s283, %s284
    %p295 = scmp.eq.s32.totalorder %s24, 0
    %p296 = por %p294, %p295
    %p297 = scmp.ne.s32.totalorder %s283, %s284
    %p298 = scmp.eq.s32.totalorder %s25, 15
    %p299 = por %p297, %p298
    %p301 = scmp.ne.s32.totalorder %s284, %s300
    %p302 = scmp.eq.s32.totalorder %s25, 0
    %p303 = por %p301, %p302
    %s304 = ssub.s32 %s19, %s26
    %p305 = scmp.eq.s32.totalorder %s304, 0
    %s307 = sadd.s32 %s306, 1
    %s308 = scalar_select %p305, %s306, %s307
    %p311 = pneg %p305
    %p312 = scmp.eq.s32.totalorder %s19, 15
    %p313 = por %p311, %p312
    %p314 = scmp.ne.s32.totalorder %s306, %s309
    %p315 = scmp.eq.s32.totalorder %s19, 0
    %p316 = por %p314, %p315
    %p317 = scmp.ne.s32.totalorder %s306, %s309
    %p318 = scmp.eq.s32.totalorder %s24, 15
    %p319 = por %p317, %p318
    %p320 = scmp.ne.s32.totalorder %s309, %s310
    %p321 = scmp.eq.s32.totalorder %s24, 0
    %p322 = por %p320, %p321
    %p323 = scmp.ne.s32.totalorder %s309, %s310
    %p324 = scmp.eq.s32.totalorder %s25, 15
    %p325 = por %p323, %p324
    %p327 = scmp.ne.s32.totalorder %s310, %s326
    %p328 = scmp.eq.s32.totalorder %s25, 0
    %p329 = por %p327, %p328
    %s330 = ssub.s32 %s19, %s26
    %p331 = scmp.eq.s32.totalorder %s330, 0
    %s333 = sadd.s32 %s332, 1
    %s334 = scalar_select %p331, %s332, %s333
    %p337 = pneg %p331
    %p338 = scmp.eq.s32.totalorder %s19, 15
    %p339 = por %p337, %p338
    %p340 = scmp.ne.s32.totalorder %s332, %s335
    %p341 = scmp.eq.s32.totalorder %s19, 0
    %p342 = por %p340, %p341
    %p343 = scmp.ne.s32.totalorder %s332, %s335
    %p344 = scmp.eq.s32.totalorder %s24, 15
    %p345 = por %p343, %p344
    %p346 = scmp.ne.s32.totalorder %s335, %s336
    %p347 = scmp.eq.s32.totalorder %s24, 0
    %p348 = por %p346, %p347
    %p349 = scmp.ne.s32.totalorder %s335, %s336
    %p350 = scmp.eq.s32.totalorder %s25, 15
    %p351 = por %p349, %p350
    %p353 = scmp.ne.s32.totalorder %s336, %s352
    %p354 = scmp.eq.s32.totalorder %s25, 0
    %p355 = por %p353, %p354
    %p356 = scmp.le.s32.totalorder 1, %s19
    %p357 = scmp.lt.s32.totalorder %s19, 17
    %p358 = pnand %p356, %p357
    %p359 = pneg %p358
    // Predicated region
    $region9: #{point_transformer_last_forward.1} parent=5 // pred_check
      _
    $region10: #{point_transformer_last_forward.1} parent=5 // pred_check_branch
      %361 = sbr.rel (%p358) target = $region12
    $region11: #{point_transformer_last_forward.1} parent=5 // pred_region
      %s362 = ssub.s32 %s19, 1
      // Predicated region
      $region13: #{point_transformer_last_forward.1} parent=11 // pred_check
        %p363 = pneg %p40
      $region14: #{point_transformer_last_forward.1} parent=11 // pred_check_branch
        %365 = sbr.rel (%p363) target = $region16
      $region15: #{point_transformer_last_forward.1} parent=11 // pred_region
        _
      $region16: #{point_transformer_last_forward.1} parent=11 // pred_fallthru
        _
      // Predicated region
      $region17: #{point_transformer_last_forward.1} parent=11 // pred_check
        %p366 = pneg %p61
      $region18: #{point_transformer_last_forward.1} parent=11 // pred_check_branch
        %368 = sbr.rel (%p366) target = $region20
      $region19: #{point_transformer_last_forward.1} parent=11 // pred_region
        _
      $region20: #{point_transformer_last_forward.1} parent=11 // pred_fallthru
        _
      // Predicated region
      $region21: #{point_transformer_last_forward.1} parent=11 // pred_check
        %p369 = pneg %p82
      $region22: #{point_transformer_last_forward.1} parent=11 // pred_check_branch
        %371 = sbr.rel (%p369) target = $region24
      $region23: #{point_transformer_last_forward.1} parent=11 // pred_region
        _
      $region24: #{point_transformer_last_forward.1} parent=11 // pred_fallthru
        _
      // Predicated region
      $region25: #{point_transformer_last_forward.1} parent=11 // pred_check
        %p372 = pneg %p103
      $region26: #{point_transformer_last_forward.1} parent=11 // pred_check_branch
        %374 = sbr.rel (%p372) target = $region28
      $region27: #{point_transformer_last_forward.1} parent=11 // pred_region
        _
      $region28: #{point_transformer_last_forward.1} parent=11 // pred_fallthru
        _
      // Predicated region
      $region29: #{point_transformer_last_forward.1} parent=11 // pred_check
        %p375 = pneg %p124
      $region30: #{point_transformer_last_forward.1} parent=11 // pred_check_branch
        %377 = sbr.rel (%p375) target = $region32
      $region31: #{point_transformer_last_forward.1} parent=11 // pred_region
        _
      $region32: #{point_transformer_last_forward.1} parent=11 // pred_fallthru
        _
      // Predicated region
      $region33: #{point_transformer_last_forward.1} parent=11 // pred_check
        %p378 = pneg %p145
      $region34: #{point_transformer_last_forward.1} parent=11 // pred_check_branch
        %380 = sbr.rel (%p378) target = $region36
      $region35: #{point_transformer_last_forward.1} parent=11 // pred_region
        _
      $region36: #{point_transformer_last_forward.1} parent=11 // pred_fallthru
        _
      // Predicated region
      $region37: #{point_transformer_last_forward.1} parent=11 // pred_check
        %p381 = pneg %p166
      $region38: #{point_transformer_last_forward.1} parent=11 // pred_check_branch
        %383 = sbr.rel (%p381) target = $region40
      $region39: #{point_transformer_last_forward.1} parent=11 // pred_region
        _
      $region40: #{point_transformer_last_forward.1} parent=11 // pred_fallthru
        _
    $region12: #{point_transformer_last_forward.1} parent=5 // pred_fallthru
      _
    %p384 = scmp.lt.s32.totalorder %s19, 16
    // Predicated region
    $region41: #{point_transformer_last_forward.1} parent=5 // pred_check
      %p385 = pneg %p384
    $region42: #{point_transformer_last_forward.1} parent=5 // pred_check_branch
      %387 = sbr.rel (%p385) target = $region44
    $region43: #{point_transformer_last_forward.1} parent=5 // pred_region
      // Predicated region
      $region45: #{point_transformer_last_forward.1} parent=43 // pred_check
        %p388 = pneg %p186
      $region46: #{point_transformer_last_forward.1} parent=43 // pred_check_branch
        %390 = sbr.rel (%p388) target = $region48
      $region47: #{point_transformer_last_forward.1} parent=43 // pred_region
        %p391 = scmp.lt.s32.totalorder %s19, 15
        %s392 = scalar_select %p391, %s19, 15
        %s393 = smul.addr %s392, 10
        %s394 = smul.addr %s393, 8
        %s395 = scalar_lea.vmem %s7, %s394
      $region48: #{point_transformer_last_forward.1} parent=43 // pred_fallthru
        _
      // Predicated region
      $region49: #{point_transformer_last_forward.1} parent=43 // pred_check
        %p396 = pneg %p212
      $region50: #{point_transformer_last_forward.1} parent=43 // pred_check_branch
        %398 = sbr.rel (%p396) target = $region52
      $region51: #{point_transformer_last_forward.1} parent=43 // pred_region
        %p399 = scmp.lt.s32.totalorder %s19, 15
        %s400 = scalar_select %p399, %s19, 15
        %s401 = smul.addr %s400, 8
        %s402 = smul.addr %s401, 8
        %s403 = scalar_lea.vmem %s8, %s402
      $region52: #{point_transformer_last_forward.1} parent=43 // pred_fallthru
        _
      // Predicated region
      $region53: #{point_transformer_last_forward.1} parent=43 // pred_check
        %p404 = pneg %p238
      $region54: #{point_transformer_last_forward.1} parent=43 // pred_check_branch
        %406 = sbr.rel (%p404) target = $region56
      $region55: #{point_transformer_last_forward.1} parent=43 // pred_region
        %p407 = scmp.lt.s32.totalorder %s19, 15
        %s408 = scalar_select %p407, %s19, 15
        %s409 = smul.addr %s408, 8
        %s410 = smul.addr %s409, 8
        %s411 = scalar_lea.vmem %s9, %s410
      $region56: #{point_transformer_last_forward.1} parent=43 // pred_fallthru
        _
      // Predicated region
      $region57: #{point_transformer_last_forward.1} parent=43 // pred_check
        %p412 = pneg %p264
      $region58: #{point_transformer_last_forward.1} parent=43 // pred_check_branch
        %414 = sbr.rel (%p412) target = $region60
      $region59: #{point_transformer_last_forward.1} parent=43 // pred_region
        %p415 = scmp.lt.s32.totalorder %s19, 15
        %s416 = scalar_select %p415, %s19, 15
        %s417 = smul.addr %s416, 8
        %s418 = smul.addr %s417, 8
        %s419 = scalar_lea.vmem %s10, %s418
      $region60: #{point_transformer_last_forward.1} parent=43 // pred_fallthru
        _
      // Predicated region
      $region61: #{point_transformer_last_forward.1} parent=43 // pred_check
        %p420 = pneg %p290
      $region62: #{point_transformer_last_forward.1} parent=43 // pred_check_branch
        %422 = sbr.rel (%p420) target = $region64
      $region63: #{point_transformer_last_forward.1} parent=43 // pred_region
        %p423 = scmp.lt.s32.totalorder %s19, 15
        %s424 = scalar_select %p423, %s19, 15
        %s425 = smul.addr %s424, 8
        %s426 = smul.addr %s425, 8
        %s427 = scalar_lea.vmem %s11, %s426
      $region64: #{point_transformer_last_forward.1} parent=43 // pred_fallthru
        _
      // Predicated region
      $region65: #{point_transformer_last_forward.1} parent=43 // pred_check
        %p428 = pneg %p316
      $region66: #{point_transformer_last_forward.1} parent=43 // pred_check_branch
        %430 = sbr.rel (%p428) target = $region68
      $region67: #{point_transformer_last_forward.1} parent=43 // pred_region
        %p431 = scmp.lt.s32.totalorder %s19, 15
        %s432 = scalar_select %p431, %s19, 15
        %s433 = smul.addr %s432, 8
        %s434 = smul.addr %s433, 8
        %s435 = scalar_lea.vmem %s12, %s434
      $region68: #{point_transformer_last_forward.1} parent=43 // pred_fallthru
        _
    $region44: #{point_transformer_last_forward.1} parent=5 // pred_fallthru
      _
    %p436 = scmp.le.s32.totalorder 1, %s19
    %p437 = scmp.lt.s32.totalorder %s19, 17
    %p438 = pnand %p436, %p437
    %p439 = pneg %p438
    // Predicated region
    $region69: #{point_transformer_last_forward.1} parent=5 // pred_check
      _
    $region70: #{point_transformer_last_forward.1} parent=5 // pred_check_branch
      %441 = sbr.rel (%p438) target = $region72
    $region71: #{point_transformer_last_forward.1} parent=5 // pred_region
      %s442 = ssub.s32 %s19, 1
      %p443 = pneg %p40
      %p444 = pneg %p37
      %p445 = pneg %p61
      %p446 = pneg %p58
      %p447 = pneg %p82
      %p448 = pneg %p79
      %p449 = pneg %p103
      %p450 = pneg %p100
      %p451 = pneg %p124
      %p452 = pneg %p121
      %p453 = pneg %p145
      %p454 = pneg %p142
      %p455 = pneg %p166
      %p456 = pneg %p163
      %p457 = scmp.lt.s32.totalorder %s24, 15
      %s458 = scalar_select %p457, %s24, 15
      %s459 = smul.addr %s458, 10
      %s460 = smul.addr %s459, 8
      %s461 = scalar_lea.vmem %s7, %s460
      %p462 = pneg %p192
      %p463 = pneg %p189
      %p464 = scmp.lt.s32.totalorder %s24, 15
      %s465 = scalar_select %p464, %s24, 15
      %s466 = smul.addr %s465, 8
      %s467 = smul.addr %s466, 8
      %s468 = scalar_lea.vmem %s8, %s467
      %p469 = pneg %p218
      %p470 = pneg %p215
      %p471 = scmp.lt.s32.totalorder %s24, 15
      %s472 = scalar_select %p471, %s24, 15
      %s473 = smul.addr %s472, 8
      %s474 = smul.addr %s473, 8
      %s475 = scalar_lea.vmem %s9, %s474
      %p476 = pneg %p244
      %p477 = pneg %p241
      %p478 = scmp.lt.s32.totalorder %s24, 15
      %s479 = scalar_select %p478, %s24, 15
      %s480 = smul.addr %s479, 8
      %s481 = smul.addr %s480, 8
      %s482 = scalar_lea.vmem %s10, %s481
      %p483 = pneg %p270
      %p484 = pneg %p267
      %p485 = scmp.lt.s32.totalorder %s24, 15
      %s486 = scalar_select %p485, %s24, 15
      %s487 = smul.addr %s486, 8
      %s488 = smul.addr %s487, 8
      %s489 = scalar_lea.vmem %s11, %s488
      %p490 = pneg %p296
      %p491 = pneg %p293
      %p492 = scmp.lt.s32.totalorder %s24, 15
      %s493 = scalar_select %p492, %s24, 15
      %s494 = smul.addr %s493, 8
      %s495 = smul.addr %s494, 8
      %s496 = scalar_lea.vmem %s12, %s495
      %p497 = pneg %p322
      %p498 = pneg %p319
      %p499 = pneg %p348
      %p500 = pneg %p345
      %p501 = scmp.lt.s32.totalorder %s24, 15
      %s502 = scalar_select %p501, %s24, 15
      %s503 = smul.addr %s502, 8
      %s504 = smul.addr %s503, 8
      %s505 = scalar_lea.vmem %s13, %s504
      %p506 = scmp.lt.s32.totalorder %s24, 15
      %s507 = scalar_select %p506, %s24, 15
      %s508 = smul.addr %s507, 10
      %s509 = smul.addr %s508, 8
      %s510 = scalar_lea.vmem %s7, %s509
      %p511 = scmp.lt.s32.totalorder %s24, 15
      %s512 = scalar_select %p511, %s24, 15
      %s513 = smul.addr %s512, 8
      %s514 = smul.addr %s513, 8
      %s515 = scalar_lea.vmem %s8, %s514
      %p516 = scmp.lt.s32.totalorder %s24, 15
      %s517 = scalar_select %p516, %s24, 15
      %s518 = smul.addr %s517, 8
      %s519 = smul.addr %s518, 8
      %s520 = scalar_lea.vmem %s9, %s519
      %p521 = scmp.lt.s32.totalorder %s24, 15
      %s522 = scalar_select %p521, %s24, 15
      %s523 = smul.addr %s522, 8
      %s524 = smul.addr %s523, 8
      %s525 = scalar_lea.vmem %s10, %s524
      %p526 = scmp.lt.s32.totalorder %s24, 15
      %s527 = scalar_select %p526, %s24, 15
      %s528 = smul.addr %s527, 8
      %s529 = smul.addr %s528, 8
      %s530 = scalar_lea.vmem %s11, %s529
      %p531 = scmp.lt.s32.totalorder %s24, 15
      %s532 = scalar_select %p531, %s24, 15
      %s533 = smul.addr %s532, 8
      %s534 = smul.addr %s533, 8
      %s535 = scalar_lea.vmem %s12, %s534
      %p536 = scmp.lt.s32.totalorder %s24, 15
      %s537 = scalar_select %p536, %s24, 15
      %s538 = smul.addr %s537, 8
      %s539 = smul.addr %s538, 8
      %s540 = scalar_lea.vmem %s13, %s539
      %p541 = scmp.eq.s32.totalorder %s24, 0
      // Predicated region
      $region73: #{point_transformer_last_forward.1} parent=71 // pred_check
        %p542 = pneg %p541
      $region74: #{point_transformer_last_forward.1} parent=71 // pred_check_branch
        %544 = sbr.rel (%p542) target = $region76
      $region75: #{point_transformer_last_forward.1} parent=71 // pred_region
        %v545 = vld [vmem:[%s1] sm:$0xff]
        %v546 = vld [vmem:[%s1 + $0x8] sm:$0xff]
        %v547 = vld [vmem:[%s1 + $0x10] sm:$0xff]
        %v548 = vld [vmem:[%s1 + $0x18] sm:$0xff]
        %v549 = vld [vmem:[%s1 + $0x20] sm:$0xff]
        %v550 = vld [vmem:[%s1 + $0x28] sm:$0xff]
        %v551 = vld [vmem:[%s1 + $0x30] sm:$0xff]
        %v552 = vld [vmem:[%s1 + $0x38] sm:$0xff]
        %v553 = vld [vmem:[%s0] sm:$0xff]
        %v554 = vld [vmem:[%s0 + $0x8] sm:$0xff]
        %v555 = vld [vmem:[%s0 + $0x10] sm:$0xff]
        %v556 = vld [vmem:[%s0 + $0x18] sm:$0xff]
        %v557 = vld [vmem:[%s0 + $0x20] sm:$0xff]
        %v558 = vld [vmem:[%s0 + $0x28] sm:$0xff]
        %v559 = vld [vmem:[%s0 + $0x30] sm:$0xff]
        %v560 = vld [vmem:[%s0 + $0x38] sm:$0xff]
        %vm561 = vcmask 523264
        %v563 = vsel %vm561, %v545, 0
        %v566 = vsel %vm561, %v546, 0
        %v569 = vsel %vm561, %v547, 0
        %v572 = vsel %vm561, %v548, 0
        %v575 = vsel %vm561, %v549, 0
        %v578 = vsel %vm561, %v550, 0
        %v581 = vsel %vm561, %v551, 0
        %v584 = vsel %vm561, %v552, 0
        %586 = vmatprep.subr.mxu0 0.0
        %587 = vmatpush1.msra.mxu0 %v553
        %588 = vmatprep.subr.mxu0 0.0
        %589 = vmatpush1.msra.mxu0 %v554
        %590 = vmatprep.subr.mxu0 0.0
        %591 = vmatpush1.msra.mxu0 %v555
        %592 = vmatprep.subr.mxu0 0.0
        %593 = vmatpush1.msra.mxu0 %v556
        %594 = vmatprep.subr.mxu0 0.0
        %595 = vmatpush1.msra.mxu0 %v557
        %596 = vmatprep.subr.mxu0 0.0
        %597 = vmatpush1.msra.mxu0 %v558
        %598 = vmatprep.subr.mxu0 0.0
        %599 = vmatpush1.msra.mxu0 %v559
        %600 = vmatprep.subr.mxu0 0.0
        %601 = vmatpush1.msra.mxu0 %v560
        %602 = vmatprep.subr.mxu0 0.0
        %603 = vmatpush1.msra.mxu0 0.0
        %604 = vmatprep.subr.mxu0 0.0
        %605 = vmatpush1.msra.mxu0 0.0
        %606 = vmatprep.subr.mxu0 0.0
        %607 = vmatpush1.msra.mxu0 0.0
        %608 = vmatprep.subr.mxu0 0.0
        %609 = vmatpush1.msra.mxu0 0.0
        %610 = vmatprep.subr.mxu0 0.0
        %611 = vmatpush1.msra.mxu0 0.0
        %612 = vmatprep.subr.mxu0 0.0
        %613 = vmatpush1.msra.mxu0 0.0
        %614 = vmatprep.subr.mxu0 0.0
        %615 = vmatpush1.msra.mxu0 0.0
        %616 = vmatprep.subr.mxu0 0.0
        %617 = vmatpush1.msra.mxu0 0.0
        %618 = vmatprep.subr.mxu0 0.0
        %619 = vmatpush1.msra.mxu0 0.0
        %620 = vmatprep.subr.mxu0 0.0
        %621 = vmatpush1.msra.mxu0 0.0
        %622 = vmatprep.subr.mxu0 0.0
        %623 = vmatpush1.msra.mxu0 0.0
        %624 = vmatprep.subr.mxu0 0.0
        %625 = vmatpush1.msra.mxu0 0.0
        %626 = vmatprep.subr.mxu0 0.0
        %627 = vmatpush1.msra.mxu0 0.0
        %628 = vmatprep.subr.mxu0 0.0
        %629 = vmatpush1.msra.mxu0 0.0
        %630 = vmatprep.subr.mxu0 0.0
        %631 = vmatpush1.msra.mxu0 0.0
        %632 = vmatprep.subr.mxu0 0.0
        %633 = vmatpush1.msra.mxu0 0.0
        %634 = vmatprep.subr.mxu0 0.0
        %635 = vmatpush1.msra.mxu0 0.0
        %636 = vmatprep.subr.mxu0 0.0
        %637 = vmatpush1.msra.mxu0 0.0
        %638 = vmatprep.subr.mxu0 0.0
        %639 = vmatpush1.msra.mxu0 0.0
        %640 = vmatprep.subr.mxu0 0.0
        %641 = vmatpush1.msra.mxu0 0.0
        %642 = vmatprep.subr.mxu0 0.0
        %643 = vmatpush1.msra.mxu0 0.0
        %644 = vmatprep.subr.mxu0 0.0
        %645 = vmatpush1.msra.mxu0 0.0
        %646 = vmatprep.subr.mxu0 0.0
        %647 = vmatpush1.msra.mxu0 0.0
        %648 = vmatprep.subr.mxu0 0.0
        %649 = vmatpush1.msra.mxu0 0.0
        %650 = vmatprep.mubr.f32.mxu0 0.0
        %651 = vmatmul.mubr.f32.gmra.mrb[0].mxu0 %v563
        %v652 = vpop.f32.mrb[0].mxu0
        %v653 = vadd.f32 0.0, %v652
        %v654 = vpop.f32.mrb[0].mxu0
        %655 = vmatprep.mubr.f32.mxu0 0.0
        %656 = vmatmul.mubr.f32.gmra.mrb[0].mxu0 %v566
        %v657 = vpop.f32.mrb[0].mxu0
        %v658 = vadd.f32 0.0, %v657
        %v659 = vpop.f32.mrb[0].mxu0
        %660 = vmatprep.mubr.f32.mxu0 0.0
        %661 = vmatmul.mubr.f32.gmra.mrb[0].mxu0 %v569
        %v662 = vpop.f32.mrb[0].mxu0
        %v663 = vadd.f32 0.0, %v662
        %v664 = vpop.f32.mrb[0].mxu0
        %665 = vmatprep.mubr.f32.mxu0 0.0
        %666 = vmatmul.mubr.f32.gmra.mrb[0].mxu0 %v572
        %v667 = vpop.f32.mrb[0].mxu0
        %v668 = vadd.f32 0.0, %v667
        %v669 = vpop.f32.mrb[0].mxu0
        %670 = vmatprep.mubr.f32.mxu0 0.0
        %671 = vmatmul.mubr.f32.gmra.mrb[0].mxu0 %v575
        %v672 = vpop.f32.mrb[0].mxu0
        %v673 = vadd.f32 0.0, %v672
        %v674 = vpop.f32.mrb[0].mxu0
        %675 = vmatprep.mubr.f32.mxu0 0.0
        %676 = vmatmul.mubr.f32.gmra.mrb[0].mxu0 %v578
        %v677 = vpop.f32.mrb[0].mxu0
        %v678 = vadd.f32 0.0, %v677
        %v679 = vpop.f32.mrb[0].mxu0
        %680 = vmatprep.mubr.f32.mxu0 0.0
        %681 = vmatmul.mubr.f32.gmra.mrb[0].mxu0 %v581
        %v682 = vpop.f32.mrb[0].mxu0
        %v683 = vadd.f32 0.0, %v682
        %v684 = vpop.f32.mrb[0].mxu0
        %685 = vmatprep.mubr.f32.mxu0 0.0
        %686 = vmatmul.mubr.f32.gmra.mrb[0].mxu0 %v584
        %v687 = vpop.f32.mrb[0].mxu0
        %v688 = vadd.f32 0.0, %v687
        %v689 = vpop.f32.mrb[0].mxu0
        %690 = vdwg.mxu0
        %v691 = vld [vmem:[%s2] sm:$0xff]
        %v692 = vld [vmem:[%s2 + $0x8] sm:$0xff]
        %v693 = vld [vmem:[%s2 + $0x10] sm:$0xff]
        %v694 = vld [vmem:[%s2 + $0x18] sm:$0xff]
        %v695 = vld [vmem:[%s2 + $0x20] sm:$0xff]
        %v696 = vld [vmem:[%s2 + $0x28] sm:$0xff]
        %v697 = vld [vmem:[%s2 + $0x30] sm:$0xff]
        %v698 = vld [vmem:[%s2 + $0x38] sm:$0xff]
        %v699 = vld [vmem:[%s3] sm:$0xff]
        %v700 = vld [vmem:[%s3 + $0x8] sm:$0xff]
        %v701 = vld [vmem:[%s3 + $0x10] sm:$0xff]
        %v702 = vld [vmem:[%s3 + $0x18] sm:$0xff]
        %v703 = vld [vmem:[%s3 + $0x20] sm:$0xff]
        %v704 = vld [vmem:[%s3 + $0x28] sm:$0xff]
        %v705 = vld [vmem:[%s3 + $0x30] sm:$0xff]
        %v706 = vld [vmem:[%s3 + $0x38] sm:$0xff]
        %v707 = vsel %vm561, %v653, 0.0
        %708 = vadd.xlane.f32.xlu0 %v707
        %v709 = vpop.xlane.xlu0 %708
        %v710 = vsel %vm561, %v658, 0.0
        %711 = vadd.xlane.f32.xlu0 %v710
        %v712 = vpop.xlane.xlu0 %711
        %v713 = vsel %vm561, %v663, 0.0
        %714 = vadd.xlane.f32.xlu0 %v713
        %v715 = vpop.xlane.xlu0 %714
        %v716 = vsel %vm561, %v668, 0.0
        %717 = vadd.xlane.f32.xlu0 %v716
        %v718 = vpop.xlane.xlu0 %717
        %v719 = vsel %vm561, %v673, 0.0
        %720 = vadd.xlane.f32.xlu0 %v719
        %v721 = vpop.xlane.xlu0 %720
        %v722 = vsel %vm561, %v678, 0.0
        %723 = vadd.xlane.f32.xlu0 %v722
        %v724 = vpop.xlane.xlu0 %723
        %v725 = vsel %vm561, %v683, 0.0
        %726 = vadd.xlane.f32.xlu0 %v725
        %v727 = vpop.xlane.xlu0 %726
        %v728 = vsel %vm561, %v688, 0.0
        %729 = vadd.xlane.f32.xlu0 %v728
        %v730 = vpop.xlane.xlu0 %729
        %v731 = vmul.f32 %v653, %v653
        %v732 = vmul.f32 %v658, %v658
        %v733 = vmul.f32 %v663, %v663
        %v734 = vmul.f32 %v668, %v668
        %v735 = vmul.f32 %v673, %v673
        %v736 = vmul.f32 %v678, %v678
        %v737 = vmul.f32 %v683, %v683
        %v738 = vmul.f32 %v688, %v688
        %v739 = vsel %vm561, %v731, 0.0
        %740 = vadd.xlane.f32.xlu0 %v739
        %v741 = vpop.xlane.xlu0 %740
        %v742 = vsel %vm561, %v732, 0.0
        %743 = vadd.xlane.f32.xlu0 %v742
        %v744 = vpop.xlane.xlu0 %743
        %v745 = vsel %vm561, %v733, 0.0
        %746 = vadd.xlane.f32.xlu0 %v745
        %v747 = vpop.xlane.xlu0 %746
        %v748 = vsel %vm561, %v734, 0.0
        %749 = vadd.xlane.f32.xlu0 %v748
        %v750 = vpop.xlane.xlu0 %749
        %v751 = vsel %vm561, %v735, 0.0
        %752 = vadd.xlane.f32.xlu0 %v751
        %v753 = vpop.xlane.xlu0 %752
        %v754 = vsel %vm561, %v736, 0.0
        %755 = vadd.xlane.f32.xlu0 %v754
        %v756 = vpop.xlane.xlu0 %755
        %v757 = vsel %vm561, %v737, 0.0
        %758 = vadd.xlane.f32.xlu0 %v757
        %v759 = vpop.xlane.xlu0 %758
        %v760 = vsel %vm561, %v738, 0.0
        %761 = vadd.xlane.f32.xlu0 %v760
        %v762 = vpop.xlane.xlu0 %761
        %v763 = vmul.f32 %v709, 0.015625
        %v764 = vmul.f32 %v712, 0.015625
        %v765 = vmul.f32 %v715, 0.015625
        %v766 = vmul.f32 %v718, 0.015625
        %v767 = vmul.f32 %v721, 0.015625
        %v768 = vmul.f32 %v724, 0.015625
        %v769 = vmul.f32 %v727, 0.015625
        %v770 = vmul.f32 %v730, 0.015625
        %v771 = vmul.f32 %v741, 0.015625
        %v772 = vmul.f32 %v744, 0.015625
        %v773 = vmul.f32 %v747, 0.015625
        %v774 = vmul.f32 %v750, 0.015625
        %v775 = vmul.f32 %v753, 0.015625
        %v776 = vmul.f32 %v756, 0.015625
        %v777 = vmul.f32 %v759, 0.015625
        %v778 = vmul.f32 %v762, 0.015625
        %v779 = vmul.f32 %v763, %v763
        %v780 = vmul.f32 %v764, %v764
        %v781 = vmul.f32 %v765, %v765
        %v782 = vmul.f32 %v766, %v766
        %v783 = vmul.f32 %v767, %v767
        %v784 = vmul.f32 %v768, %v768
        %v785 = vmul.f32 %v769, %v769
        %v786 = vmul.f32 %v770, %v770
        %v787 = vsub.f32 %v771, %v779
        %v788 = vsub.f32 %v772, %v780
        %v789 = vsub.f32 %v773, %v781
        %v790 = vsub.f32 %v774, %v782
        %v791 = vsub.f32 %v775, %v783
        %v792 = vsub.f32 %v776, %v784
        %v793 = vsub.f32 %v777, %v785
        %v794 = vsub.f32 %v778, %v786
        %v795 = vadd.f32 %v787, 1e-05
        %v796 = vadd.f32 %v788, 1e-05
        %v797 = vadd.f32 %v789, 1e-05
        %v798 = vadd.f32 %v790, 1e-05
        %v799 = vadd.f32 %v791, 1e-05
        %v800 = vadd.f32 %v792, 1e-05
        %v801 = vadd.f32 %v793, 1e-05
        %v802 = vadd.f32 %v794, 1e-05
        %v803 = vrsqrt.pop %v795
        %v804 = vrsqrt.pop %v796
        %v805 = vrsqrt.pop %v797
        %v806 = vrsqrt.pop %v798
        %v807 = vrsqrt.pop %v799
        %v808 = vrsqrt.pop %v800
        %v809 = vrsqrt.pop %v801
        %v810 = vrsqrt.pop %v802
        %v811 = vmul.f32 %v803, %v691
        %v812 = vmul.f32 %v804, %v692
        %v813 = vmul.f32 %v805, %v693
        %v814 = vmul.f32 %v806, %v694
        %v815 = vmul.f32 %v807, %v695
        %v816 = vmul.f32 %v808, %v696
        %v817 = vmul.f32 %v809, %v697
        %v818 = vmul.f32 %v810, %v698
        %v819 = vsub.f32 %v653, %v763
        %v820 = vsub.f32 %v658, %v764
        %v821 = vsub.f32 %v663, %v765
        %v822 = vsub.f32 %v668, %v766
        %v823 = vsub.f32 %v673, %v767
        %v824 = vsub.f32 %v678, %v768
        %v825 = vsub.f32 %v683, %v769
        %v826 = vsub.f32 %v688, %v770
        %828 = vset.pattern.permute.xlu0 0
        %829 = vperm.xlu0 %828, %v811
        %v830 = vpop.permute.xlu0 %829
        %833 = vset.pattern.permute.xlu0 0
        %834 = vperm.xlu0 %833, %v812
        %v835 = vpop.permute.xlu0 %834
        %838 = vset.pattern.permute.xlu0 0
        %839 = vperm.xlu0 %838, %v813
        %v840 = vpop.permute.xlu0 %839
        %843 = vset.pattern.permute.xlu0 0
        %844 = vperm.xlu0 %843, %v814
        %v845 = vpop.permute.xlu0 %844
        %848 = vset.pattern.permute.xlu0 0
        %849 = vperm.xlu0 %848, %v815
        %v850 = vpop.permute.xlu0 %849
        %853 = vset.pattern.permute.xlu0 0
        %854 = vperm.xlu0 %853, %v816
        %v855 = vpop.permute.xlu0 %854
        %858 = vset.pattern.permute.xlu0 0
        %859 = vperm.xlu0 %858, %v817
        %v860 = vpop.permute.xlu0 %859
        %863 = vset.pattern.permute.xlu0 0
        %864 = vperm.xlu0 %863, %v818
        %v865 = vpop.permute.xlu0 %864
        %v867 = vmul.f32 %v819, %v830
        %v868 = vmul.f32 %v820, %v835
        %v869 = vmul.f32 %v821, %v840
        %v870 = vmul.f32 %v822, %v845
        %v871 = vmul.f32 %v823, %v850
        %v872 = vmul.f32 %v824, %v855
        %v873 = vmul.f32 %v825, %v860
        %v874 = vmul.f32 %v826, %v865
        %876 = vset.pattern.permute.xlu0 0
        %877 = vperm.xlu0 %876, %v699
        %v878 = vpop.permute.xlu0 %877
        %881 = vset.pattern.permute.xlu0 0
        %882 = vperm.xlu0 %881, %v700
        %v883 = vpop.permute.xlu0 %882
        %886 = vset.pattern.permute.xlu0 0
        %887 = vperm.xlu0 %886, %v701
        %v888 = vpop.permute.xlu0 %887
        %891 = vset.pattern.permute.xlu0 0
        %892 = vperm.xlu0 %891, %v702
        %v893 = vpop.permute.xlu0 %892
        %896 = vset.pattern.permute.xlu0 0
        %897 = vperm.xlu0 %896, %v703
        %v898 = vpop.permute.xlu0 %897
        %901 = vset.pattern.permute.xlu0 0
        %902 = vperm.xlu0 %901, %v704
        %v903 = vpop.permute.xlu0 %902
        %906 = vset.pattern.permute.xlu0 0
        %907 = vperm.xlu0 %906, %v705
        %v908 = vpop.permute.xlu0 %907
        %911 = vset.pattern.permute.xlu0 0
        %912 = vperm.xlu0 %911, %v706
        %v913 = vpop.permute.xlu0 %912
        %v915 = vadd.f32 %v867, %v878
        %v916 = vadd.f32 %v868, %v883
        %v917 = vadd.f32 %v869, %v888
        %v918 = vadd.f32 %v870, %v893
        %v919 = vadd.f32 %v871, %v898
        %v920 = vadd.f32 %v872, %v903
        %v921 = vadd.f32 %v873, %v908
        %v922 = vadd.f32 %v874, %v913
        %v923 = vmax.f32 %v915, 0.0
        %v924 = vmax.f32 %v916, 0.0
        %v925 = vmax.f32 %v917, 0.0
        %v926 = vmax.f32 %v918, 0.0
        %v927 = vmax.f32 %v919, 0.0
        %v928 = vmax.f32 %v920, 0.0
        %v929 = vmax.f32 %v921, 0.0
        %v930 = vmax.f32 %v922, 0.0
        %v931 = vld [vmem:[%s4] sm:$0xff]
        %v932 = vld [vmem:[%s4 + $0x8] sm:$0xff]
        %v933 = vld [vmem:[%s4 + $0x10] sm:$0xff]
        %v934 = vld [vmem:[%s4 + $0x18] sm:$0xff]
        %v935 = vld [vmem:[%s4 + $0x20] sm:$0xff]
        %v936 = vld [vmem:[%s4 + $0x28] sm:$0xff]
        %v937 = vld [vmem:[%s4 + $0x30] sm:$0xff]
        %v938 = vld [vmem:[%s4 + $0x38] sm:$0xff]
        %v940 = vsel %vm561, %v931, 0
        %v943 = vsel %vm561, %v932, 0
        %v946 = vsel %vm561, %v933, 0
        %v949 = vsel %vm561, %v934, 0
        %v952 = vsel %vm561, %v935, 0
        %v955 = vsel %vm561, %v936, 0
        %v958 = vsel %vm561, %v937, 0
        %v961 = vsel %vm561, %v938, 0
        %963 = vmatprep.subr.mxu0 0.0
        %964 = vmatpush1.msra.mxu0 %v923
        %965 = vmatprep.subr.mxu0 0.0
        %966 = vmatpush1.msra.mxu0 %v924
        %967 = vmatprep.subr.mxu0 0.0
        %968 = vmatpush1.msra.mxu0 %v925
        %969 = vmatprep.subr.mxu0 0.0
        %970 = vmatpush1.msra.mxu0 %v926
        %971 = vmatprep.subr.mxu0 0.0
        %972 = vmatpush1.msra.mxu0 %v927
        %973 = vmatprep.subr.mxu0 0.0
        %974 = vmatpush1.msra.mxu0 %v928
        %975 = vmatprep.subr.mxu0 0.0
        %976 = vmatpush1.msra.mxu0 %v929
        %977 = vmatprep.subr.mxu0 0.0
        %978 = vmatpush1.msra.mxu0 %v930
        %979 = vmatprep.subr.mxu0 0.0
        %980 = vmatpush1.msra.mxu0 0.0
        %981 = vmatprep.subr.mxu0 0.0
        %982 = vmatpush1.msra.mxu0 0.0
        %983 = vmatprep.subr.mxu0 0.0
        %984 = vmatpush1.msra.mxu0 0.0
        %985 = vmatprep.subr.mxu0 0.0
        %986 = vmatpush1.msra.mxu0 0.0
        %987 = vmatprep.subr.mxu0 0.0
        %988 = vmatpush1.msra.mxu0 0.0
        %989 = vmatprep.subr.mxu0 0.0
        %990 = vmatpush1.msra.mxu0 0.0
        %991 = vmatprep.subr.mxu0 0.0
        %992 = vmatpush1.msra.mxu0 0.0
        %993 = vmatprep.subr.mxu0 0.0
        %994 = vmatpush1.msra.mxu0 0.0
        %995 = vmatprep.subr.mxu0 0.0
        %996 = vmatpush1.msra.mxu0 0.0
        %997 = vmatprep.subr.mxu0 0.0
        %998 = vmatpush1.msra.mxu0 0.0
        %999 = vmatprep.subr.mxu0 0.0
        %1000 = vmatpush1.msra.mxu0 0.0
        %1001 = vmatprep.subr.mxu0 0.0
        %1002 = vmatpush1.msra.mxu0 0.0
        %1003 = vmatprep.subr.mxu0 0.0
        %1004 = vmatpush1.msra.mxu0 0.0
        %1005 = vmatprep.subr.mxu0 0.0
        %1006 = vmatpush1.msra.mxu0 0.0
        %1007 = vmatprep.subr.mxu0 0.0
        %1008 = vmatpush1.msra.mxu0 0.0
        %1009 = vmatprep.subr.mxu0 0.0
        %1010 = vmatpush1.msra.mxu0 0.0
        %1011 = vmatprep.subr.mxu0 0.0
        %1012 = vmatpush1.msra.mxu0 0.0
        %1013 = vmatprep.subr.mxu0 0.0
        %1014 = vmatpush1.msra.mxu0 0.0
        %1015 = vmatprep.subr.mxu0 0.0
        %1016 = vmatpush1.msra.mxu0 0.0
        %1017 = vmatprep.subr.mxu0 0.0
        %1018 = vmatpush1.msra.mxu0 0.0
        %1019 = vmatprep.subr.mxu0 0.0
        %1020 = vmatpush1.msra.mxu0 0.0
        %1021 = vmatprep.subr.mxu0 0.0
        %1022 = vmatpush1.msra.mxu0 0.0
        %1023 = vmatprep.subr.mxu0 0.0
        %1024 = vmatpush1.msra.mxu0 0.0
        %1025 = vmatprep.subr.mxu0 0.0
        %1026 = vmatpush1.msra.mxu0 0.0
        %1027 = vmatprep.mubr.f32.mxu0 0.0
        %1028 = vmatmul.mubr.f32.gmra.mrb[0].mxu0 %v940
        %v1029 = vpop.f32.mrb[0].mxu0
        %v1030 = vadd.f32 0.0, %v1029
        %v1031 = vpop.f32.mrb[0].mxu0
        %1032 = vmatprep.mubr.f32.mxu0 0.0
        %1033 = vmatmul.mubr.f32.gmra.mrb[0].mxu0 %v943
        %v1034 = vpop.f32.mrb[0].mxu0
        %v1035 = vadd.f32 0.0, %v1034
        %v1036 = vpop.f32.mrb[0].mxu0
        %1037 = vmatprep.mubr.f32.mxu0 0.0
        %1038 = vmatmul.mubr.f32.gmra.mrb[0].mxu0 %v946
        %v1039 = vpop.f32.mrb[0].mxu0
        %v1040 = vadd.f32 0.0, %v1039
        %v1041 = vpop.f32.mrb[0].mxu0
        %1042 = vmatprep.mubr.f32.mxu0 0.0
        %1043 = vmatmul.mubr.f32.gmra.mrb[0].mxu0 %v949
        %v1044 = vpop.f32.mrb[0].mxu0
        %v1045 = vadd.f32 0.0, %v1044
        %v1046 = vpop.f32.mrb[0].mxu0
        %1047 = vmatprep.mubr.f32.mxu0 0.0
        %1048 = vmatmul.mubr.f32.gmra.mrb[0].mxu0 %v952
        %v1049 = vpop.f32.mrb[0].mxu0
        %v1050 = vadd.f32 0.0, %v1049
        %v1051 = vpop.f32.mrb[0].mxu0
        %1052 = vmatprep.mubr.f32.mxu0 0.0
        %1053 = vmatmul.mubr.f32.gmra.mrb[0].mxu0 %v955
        %v1054 = vpop.f32.mrb[0].mxu0
        %v1055 = vadd.f32 0.0, %v1054
        %v1056 = vpop.f32.mrb[0].mxu0
        %1057 = vmatprep.mubr.f32.mxu0 0.0
        %1058 = vmatmul.mubr.f32.gmra.mrb[0].mxu0 %v958
        %v1059 = vpop.f32.mrb[0].mxu0
        %v1060 = vadd.f32 0.0, %v1059
        %v1061 = vpop.f32.mrb[0].mxu0
        %1062 = vmatprep.mubr.f32.mxu0 0.0
        %1063 = vmatmul.mubr.f32.gmra.mrb[0].mxu0 %v961
        %v1064 = vpop.f32.mrb[0].mxu0
        %v1065 = vadd.f32 0.0, %v1064
        %v1066 = vpop.f32.mrb[0].mxu0
        %1067 = vdwg.mxu0
        %v1068 = vld [vmem:[%s5] sm:$0xff]
        %v1069 = vld [vmem:[%s5 + $0x8] sm:$0xff]
        %v1070 = vld [vmem:[%s5 + $0x10] sm:$0xff]
        %v1071 = vld [vmem:[%s5 + $0x18] sm:$0xff]
        %v1072 = vld [vmem:[%s5 + $0x20] sm:$0xff]
        %v1073 = vld [vmem:[%s5 + $0x28] sm:$0xff]
        %v1074 = vld [vmem:[%s5 + $0x30] sm:$0xff]
        %v1075 = vld [vmem:[%s5 + $0x38] sm:$0xff]
        %v1076 = vld [vmem:[%s6] sm:$0xff]
        %v1077 = vld [vmem:[%s6 + $0x8] sm:$0xff]
        %v1078 = vld [vmem:[%s6 + $0x10] sm:$0xff]
        %v1079 = vld [vmem:[%s6 + $0x18] sm:$0xff]
        %v1080 = vld [vmem:[%s6 + $0x20] sm:$0xff]
        %v1081 = vld [vmem:[%s6 + $0x28] sm:$0xff]
        %v1082 = vld [vmem:[%s6 + $0x30] sm:$0xff]
        %v1083 = vld [vmem:[%s6 + $0x38] sm:$0xff]
        %v1084 = vsel %vm561, %v1030, 0.0
        %1085 = vadd.xlane.f32.xlu0 %v1084
        %v1086 = vpop.xlane.xlu0 %1085
        %v1087 = vsel %vm561, %v1035, 0.0
        %1088 = vadd.xlane.f32.xlu0 %v1087
        %v1089 = vpop.xlane.xlu0 %1088
        %v1090 = vsel %vm561, %v1040, 0.0
        %1091 = vadd.xlane.f32.xlu0 %v1090
        %v1092 = vpop.xlane.xlu0 %1091
        %v1093 = vsel %vm561, %v1045, 0.0
        %1094 = vadd.xlane.f32.xlu0 %v1093
        %v1095 = vpop.xlane.xlu0 %1094
        %v1096 = vsel %vm561, %v1050, 0.0
        %1097 = vadd.xlane.f32.xlu0 %v1096
        %v1098 = vpop.xlane.xlu0 %1097
        %v1099 = vsel %vm561, %v1055, 0.0
        %1100 = vadd.xlane.f32.xlu0 %v1099
        %v1101 = vpop.xlane.xlu0 %1100
        %v1102 = vsel %vm561, %v1060, 0.0
        %1103 = vadd.xlane.f32.xlu0 %v1102
        %v1104 = vpop.xlane.xlu0 %1103
        %v1105 = vsel %vm561, %v1065, 0.0
        %1106 = vadd.xlane.f32.xlu0 %v1105
        %v1107 = vpop.xlane.xlu0 %1106
        %v1108 = vmul.f32 %v1030, %v1030
        %v1109 = vmul.f32 %v1035, %v1035
        %v1110 = vmul.f32 %v1040, %v1040
        %v1111 = vmul.f32 %v1045, %v1045
        %v1112 = vmul.f32 %v1050, %v1050
        %v1113 = vmul.f32 %v1055, %v1055
        %v1114 = vmul.f32 %v1060, %v1060
        %v1115 = vmul.f32 %v1065, %v1065
        %v1116 = vsel %vm561, %v1108, 0.0
        %1117 = vadd.xlane.f32.xlu0 %v1116
        %v1118 = vpop.xlane.xlu0 %1117
        %v1119 = vsel %vm561, %v1109, 0.0
        %1120 = vadd.xlane.f32.xlu0 %v1119
        %v1121 = vpop.xlane.xlu0 %1120
        %v1122 = vsel %vm561, %v1110, 0.0
        %1123 = vadd.xlane.f32.xlu0 %v1122
        %v1124 = vpop.xlane.xlu0 %1123
        %v1125 = vsel %vm561, %v1111, 0.0
        %1126 = vadd.xlane.f32.xlu0 %v1125
        %v1127 = vpop.xlane.xlu0 %1126
        %v1128 = vsel %vm561, %v1112, 0.0
        %1129 = vadd.xlane.f32.xlu0 %v1128
        %v1130 = vpop.xlane.xlu0 %1129
        %v1131 = vsel %vm561, %v1113, 0.0
        %1132 = vadd.xlane.f32.xlu0 %v1131
        %v1133 = vpop.xlane.xlu0 %1132
        %v1134 = vsel %vm561, %v1114, 0.0
        %1135 = vadd.xlane.f32.xlu0 %v1134
        %v1136 = vpop.xlane.xlu0 %1135
        %v1137 = vsel %vm561, %v1115, 0.0
        %1138 = vadd.xlane.f32.xlu0 %v1137
        %v1139 = vpop.xlane.xlu0 %1138
        %v1140 = vmul.f32 %v1086, 0.015625
        %v1141 = vmul.f32 %v1089, 0.015625
        %v1142 = vmul.f32 %v1092, 0.015625
        %v1143 = vmul.f32 %v1095, 0.015625
        %v1144 = vmul.f32 %v1098, 0.015625
        %v1145 = vmul.f32 %v1101, 0.015625
        %v1146 = vmul.f32 %v1104, 0.015625
        %v1147 = vmul.f32 %v1107, 0.015625
        %v1148 = vmul.f32 %v1118, 0.015625
        %v1149 = vmul.f32 %v1121, 0.015625
        %v1150 = vmul.f32 %v1124, 0.015625
        %v1151 = vmul.f32 %v1127, 0.015625
        %v1152 = vmul.f32 %v1130, 0.015625
        %v1153 = vmul.f32 %v1133, 0.015625
        %v1154 = vmul.f32 %v1136, 0.015625
        %v1155 = vmul.f32 %v1139, 0.015625
        %v1156 = vmul.f32 %v1140, %v1140
        %v1157 = vmul.f32 %v1141, %v1141
        %v1158 = vmul.f32 %v1142, %v1142
        %v1159 = vmul.f32 %v1143, %v1143
        %v1160 = vmul.f32 %v1144, %v1144
        %v1161 = vmul.f32 %v1145, %v1145
        %v1162 = vmul.f32 %v1146, %v1146
        %v1163 = vmul.f32 %v1147, %v1147
        %v1164 = vsub.f32 %v1148, %v1156
        %v1165 = vsub.f32 %v1149, %v1157
        %v1166 = vsub.f32 %v1150, %v1158
        %v1167 = vsub.f32 %v1151, %v1159
        %v1168 = vsub.f32 %v1152, %v1160
        %v1169 = vsub.f32 %v1153, %v1161
        %v1170 = vsub.f32 %v1154, %v1162
        %v1171 = vsub.f32 %v1155, %v1163
        %v1172 = vadd.f32 %v1164, 1e-05
        %v1173 = vadd.f32 %v1165, 1e-05
        %v1174 = vadd.f32 %v1166, 1e-05
        %v1175 = vadd.f32 %v1167, 1e-05
        %v1176 = vadd.f32 %v1168, 1e-05
        %v1177 = vadd.f32 %v1169, 1e-05
        %v1178 = vadd.f32 %v1170, 1e-05
        %v1179 = vadd.f32 %v1171, 1e-05
        %v1180 = vrsqrt.pop %v1172
        %v1181 = vrsqrt.pop %v1173
        %v1182 = vrsqrt.pop %v1174
        %v1183 = vrsqrt.pop %v1175
        %v1184 = vrsqrt.pop %v1176
        %v1185 = vrsqrt.pop %v1177
        %v1186 = vrsqrt.pop %v1178
        %v1187 = vrsqrt.pop %v1179
        %v1188 = vmul.f32 %v1180, %v1068
        %v1189 = vmul.f32 %v1181, %v1069
        %v1190 = vmul.f32 %v1182, %v1070
        %v1191 = vmul.f32 %v1183, %v1071
        %v1192 = vmul.f32 %v1184, %v1072
        %v1193 = vmul.f32 %v1185, %v1073
        %v1194 = vmul.f32 %v1186, %v1074
        %v1195 = vmul.f32 %v1187, %v1075
        %v1196 = vsub.f32 %v1030, %v1140
        %v1197 = vsub.f32 %v1035, %v1141
        %v1198 = vsub.f32 %v1040, %v1142
        %v1199 = vsub.f32 %v1045, %v1143
        %v1200 = vsub.f32 %v1050, %v1144
        %v1201 = vsub.f32 %v1055, %v1145
        %v1202 = vsub.f32 %v1060, %v1146
        %v1203 = vsub.f32 %v1065, %v1147
        %1205 = vset.pattern.permute.xlu0 0
        %1206 = vperm.xlu0 %1205, %v1188
        %v1207 = vpop.permute.xlu0 %1206
        %1210 = vset.pattern.permute.xlu0 0
        %1211 = vperm.xlu0 %1210, %v1189
        %v1212 = vpop.permute.xlu0 %1211
        %1215 = vset.pattern.permute.xlu0 0
        %1216 = vperm.xlu0 %1215, %v1190
        %v1217 = vpop.permute.xlu0 %1216
        %1220 = vset.pattern.permute.xlu0 0
        %1221 = vperm.xlu0 %1220, %v1191
        %v1222 = vpop.permute.xlu0 %1221
        %1225 = vset.pattern.permute.xlu0 0
        %1226 = vperm.xlu0 %1225, %v1192
        %v1227 = vpop.permute.xlu0 %1226
        %1230 = vset.pattern.permute.xlu0 0
        %1231 = vperm.xlu0 %1230, %v1193
        %v1232 = vpop.permute.xlu0 %1231
        %1235 = vset.pattern.permute.xlu0 0
        %1236 = vperm.xlu0 %1235, %v1194
        %v1237 = vpop.permute.xlu0 %1236
        %1240 = vset.pattern.permute.xlu0 0
        %1241 = vperm.xlu0 %1240, %v1195
        %v1242 = vpop.permute.xlu0 %1241
        %v1244 = vmul.f32 %v1196, %v1207
        %v1245 = vmul.f32 %v1197, %v1212
        %v1246 = vmul.f32 %v1198, %v1217
        %v1247 = vmul.f32 %v1199, %v1222
        %v1248 = vmul.f32 %v1200, %v1227
        %v1249 = vmul.f32 %v1201, %v1232
        %v1250 = vmul.f32 %v1202, %v1237
        %v1251 = vmul.f32 %v1203, %v1242
        %1253 = vset.pattern.permute.xlu0 0
        %1254 = vperm.xlu0 %1253, %v1076
        %v1255 = vpop.permute.xlu0 %1254
        %1258 = vset.pattern.permute.xlu0 0
        %1259 = vperm.xlu0 %1258, %v1077
        %v1260 = vpop.permute.xlu0 %1259
        %1263 = vset.pattern.permute.xlu0 0
        %1264 = vperm.xlu0 %1263, %v1078
        %v1265 = vpop.permute.xlu0 %1264
        %1268 = vset.pattern.permute.xlu0 0
        %1269 = vperm.xlu0 %1268, %v1079
        %v1270 = vpop.permute.xlu0 %1269
        %1273 = vset.pattern.permute.xlu0 0
        %1274 = vperm.xlu0 %1273, %v1080
        %v1275 = vpop.permute.xlu0 %1274
        %1278 = vset.pattern.permute.xlu0 0
        %1279 = vperm.xlu0 %1278, %v1081
        %v1280 = vpop.permute.xlu0 %1279
        %1283 = vset.pattern.permute.xlu0 0
        %1284 = vperm.xlu0 %1283, %v1082
        %v1285 = vpop.permute.xlu0 %1284
        %1288 = vset.pattern.permute.xlu0 0
        %1289 = vperm.xlu0 %1288, %v1083
        %v1290 = vpop.permute.xlu0 %1289
        %v1292 = vadd.f32 %v1244, %v1255
        %v1293 = vadd.f32 %v1245, %v1260
        %v1294 = vadd.f32 %v1246, %v1265
        %v1295 = vadd.f32 %v1247, %v1270
        %v1296 = vadd.f32 %v1248, %v1275
        %v1297 = vadd.f32 %v1249, %v1280
        %v1298 = vadd.f32 %v1250, %v1285
        %v1299 = vadd.f32 %v1251, %v1290
        %v1300 = vmax.f32 %v1292, 0.0
        %v1301 = vmax.f32 %v1293, 0.0
        %v1302 = vmax.f32 %v1294, 0.0
        %v1303 = vmax.f32 %v1295, 0.0
        %v1304 = vmax.f32 %v1296, 0.0
        %v1305 = vmax.f32 %v1297, 0.0
        %v1306 = vmax.f32 %v1298, 0.0
        %v1307 = vmax.f32 %v1299, 0.0
        %1308 = vst.msk [vmem:[#allocation2] sm:$0xff] %vm561, %v1300
        %1309 = vst.msk [vmem:[#allocation2 + $0x8] sm:$0xff] %vm561, %v1301
        %1310 = vst.msk [vmem:[#allocation2 + $0x10] sm:$0xff] %vm561, %v1302
        %1311 = vst.msk [vmem:[#allocation2 + $0x18] sm:$0xff] %vm561, %v1303
        %1312 = vst.msk [vmem:[#allocation2 + $0x20] sm:$0xff] %vm561, %v1304
        %1313 = vst.msk [vmem:[#allocation2 + $0x28] sm:$0xff] %vm561, %v1305
        %1314 = vst.msk [vmem:[#allocation2 + $0x30] sm:$0xff] %vm561, %v1306
        %1315 = vst.msk [vmem:[#allocation2 + $0x38] sm:$0xff] %vm561, %v1307
      $region76: #{point_transformer_last_forward.1} parent=71 // pred_fallthru
        _
      %v1316 = vld [vmem:[#allocation2] sm:$0xff]
      %v1317 = vld [vmem:[#allocation2 + $0x8] sm:$0xff]
      %v1318 = vld [vmem:[#allocation2 + $0x10] sm:$0xff]
      %v1319 = vld [vmem:[#allocation2 + $0x18] sm:$0xff]
      %v1320 = vld [vmem:[#allocation2 + $0x20] sm:$0xff]
      %v1321 = vld [vmem:[#allocation2 + $0x28] sm:$0xff]
      %v1322 = vld [vmem:[#allocation2 + $0x30] sm:$0xff]
      %v1323 = vld [vmem:[#allocation2 + $0x38] sm:$0xff]
      %v1324 = vld [vmem:[%s510] sm:$0xff]
      %v1325 = vld [vmem:[%s510 + $0x8] sm:$0xff]
      %v1326 = vld [vmem:[%s510 + $0x10] sm:$0xff]
      %v1327 = vld [vmem:[%s510 + $0x18] sm:$0xff]
      %v1328 = vld [vmem:[%s510 + $0x20] sm:$0xff]
      %v1329 = vld [vmem:[%s510 + $0x28] sm:$0xff]
      %v1330 = vld [vmem:[%s510 + $0x30] sm:$0xff]
      %v1331 = vld [vmem:[%s510 + $0x38] sm:$0xff]
      %v1332 = vld [vmem:[%s510 + $0x40] sm:$0xff]
      %v1333 = vld [vmem:[%s510 + $0x48] sm:$0xff]
      %v1334 = vld [vmem:[%s515] sm:$0xff]
      %v1335 = vld [vmem:[%s515 + $0x8] sm:$0xff]
      %v1336 = vld [vmem:[%s515 + $0x10] sm:$0xff]
      %v1337 = vld [vmem:[%s515 + $0x18] sm:$0xff]
      %v1338 = vld [vmem:[%s515 + $0x20] sm:$0xff]
      %v1339 = vld [vmem:[%s515 + $0x28] sm:$0xff]
      %v1340 = vld [vmem:[%s515 + $0x30] sm:$0xff]
      %v1341 = vld [vmem:[%s515 + $0x38] sm:$0xff]
      %v1342 = vld [vmem:[%s520] sm:$0xff]
      %v1343 = vld [vmem:[%s520 + $0x8] sm:$0xff]
      %v1344 = vld [vmem:[%s520 + $0x10] sm:$0xff]
      %v1345 = vld [vmem:[%s520 + $0x18] sm:$0xff]
      %v1346 = vld [vmem:[%s520 + $0x20] sm:$0xff]
      %v1347 = vld [vmem:[%s520 + $0x28] sm:$0xff]
      %v1348 = vld [vmem:[%s520 + $0x30] sm:$0xff]
      %v1349 = vld [vmem:[%s520 + $0x38] sm:$0xff]
      %v1350 = vld [vmem:[%s525] sm:$0xff]
      %v1351 = vld [vmem:[%s525 + $0x8] sm:$0xff]
      %v1352 = vld [vmem:[%s525 + $0x10] sm:$0xff]
      %v1353 = vld [vmem:[%s525 + $0x18] sm:$0xff]
      %v1354 = vld [vmem:[%s525 + $0x20] sm:$0xff]
      %v1355 = vld [vmem:[%s525 + $0x28] sm:$0xff]
      %v1356 = vld [vmem:[%s525 + $0x30] sm:$0xff]
      %v1357 = vld [vmem:[%s525 + $0x38] sm:$0xff]
      %v1358 = vld [vmem:[%s530] sm:$0xff]
      %v1359 = vld [vmem:[%s530 + $0x8] sm:$0xff]
      %v1360 = vld [vmem:[%s530 + $0x10] sm:$0xff]
      %v1361 = vld [vmem:[%s530 + $0x18] sm:$0xff]
      %v1362 = vld [vmem:[%s530 + $0x20] sm:$0xff]
      %v1363 = vld [vmem:[%s530 + $0x28] sm:$0xff]
      %v1364 = vld [vmem:[%s530 + $0x30] sm:$0xff]
      %v1365 = vld [vmem:[%s530 + $0x38] sm:$0xff]
      %v1366 = vld [vmem:[%s535] sm:$0xff]
      %v1367 = vld [vmem:[%s535 + $0x8] sm:$0xff]
      %v1368 = vld [vmem:[%s535 + $0x10] sm:$0xff]
      %v1369 = vld [vmem:[%s535 + $0x18] sm:$0xff]
      %v1370 = vld [vmem:[%s535 + $0x20] sm:$0xff]
      %v1371 = vld [vmem:[%s535 + $0x28] sm:$0xff]
      %v1372 = vld [vmem:[%s535 + $0x30] sm:$0xff]
      %v1373 = vld [vmem:[%s535 + $0x38] sm:$0xff]
      %vm1374 = vcmask 523264
      %v1376 = vsel %vm1374, %v1324, 0
      %v1379 = vsel %vm1374, %v1325, 0
      %v1382 = vsel %vm1374, %v1326, 0
      %v1385 = vsel %vm1374, %v1327, 0
      %v1388 = vsel %vm1374, %v1328, 0
      %v1391 = vsel %vm1374, %v1329, 0
      %v1394 = vsel %vm1374, %v1330, 0
      %v1397 = vsel %vm1374, %v1331, 0
      %v1400 = vsel %vm1374, %v1332, 0
      %v1403 = vsel %vm1374, %v1333, 0
      %1405 = vmatprep.subr.mxu0 0.0
      %1406 = vmatpush1.msra.mxu0 %v1316
      %1407 = vmatprep.subr.mxu0 0.0
      %1408 = vmatpush1.msra.mxu0 %v1317
      %1409 = vmatprep.subr.mxu0 0.0
      %1410 = vmatpush1.msra.mxu0 %v1318
      %1411 = vmatprep.subr.mxu0 0.0
      %1412 = vmatpush1.msra.mxu0 %v1319
      %1413 = vmatprep.subr.mxu0 0.0
      %1414 = vmatpush1.msra.mxu0 %v1320
      %1415 = vmatprep.subr.mxu0 0.0
      %1416 = vmatpush1.msra.mxu0 %v1321
      %1417 = vmatprep.subr.mxu0 0.0
      %1418 = vmatpush1.msra.mxu0 %v1322
      %1419 = vmatprep.subr.mxu0 0.0
      %1420 = vmatpush1.msra.mxu0 %v1323
      %1421 = vmatprep.subr.mxu0 0.0
      %1422 = vmatpush1.msra.mxu0 0.0
      %1423 = vmatprep.subr.mxu0 0.0
      %1424 = vmatpush1.msra.mxu0 0.0
      %1425 = vmatprep.subr.mxu0 0.0
      %1426 = vmatpush1.msra.mxu0 0.0
      %1427 = vmatprep.subr.mxu0 0.0
      %1428 = vmatpush1.msra.mxu0 0.0
      %1429 = vmatprep.subr.mxu0 0.0
      %1430 = vmatpush1.msra.mxu0 0.0
      %1431 = vmatprep.subr.mxu0 0.0
      %1432 = vmatpush1.msra.mxu0 0.0
      %1433 = vmatprep.subr.mxu0 0.0
      %1434 = vmatpush1.msra.mxu0 0.0
      %1435 = vmatprep.subr.mxu0 0.0
      %1436 = vmatpush1.msra.mxu0 0.0
      %1437 = vmatprep.subr.mxu0 0.0
      %1438 = vmatpush1.msra.mxu0 0.0
      %1439 = vmatprep.subr.mxu0 0.0
      %1440 = vmatpush1.msra.mxu0 0.0
      %1441 = vmatprep.subr.mxu0 0.0
      %1442 = vmatpush1.msra.mxu0 0.0
      %1443 = vmatprep.subr.mxu0 0.0
      %1444 = vmatpush1.msra.mxu0 0.0
      %1445 = vmatprep.subr.mxu0 0.0
      %1446 = vmatpush1.msra.mxu0 0.0
      %1447 = vmatprep.subr.mxu0 0.0
      %1448 = vmatpush1.msra.mxu0 0.0
      %1449 = vmatprep.subr.mxu0 0.0
      %1450 = vmatpush1.msra.mxu0 0.0
      %1451 = vmatprep.subr.mxu0 0.0
      %1452 = vmatpush1.msra.mxu0 0.0
      %1453 = vmatprep.subr.mxu0 0.0
      %1454 = vmatpush1.msra.mxu0 0.0
      %1455 = vmatprep.subr.mxu0 0.0
      %1456 = vmatpush1.msra.mxu0 0.0
      %1457 = vmatprep.subr.mxu0 0.0
      %1458 = vmatpush1.msra.mxu0 0.0
      %1459 = vmatprep.subr.mxu0 0.0
      %1460 = vmatpush1.msra.mxu0 0.0
      %1461 = vmatprep.subr.mxu0 0.0
      %1462 = vmatpush1.msra.mxu0 0.0
      %1463 = vmatprep.subr.mxu0 0.0
      %1464 = vmatpush1.msra.mxu0 0.0
      %1465 = vmatprep.subr.mxu0 0.0
      %1466 = vmatpush1.msra.mxu0 0.0
      %1467 = vmatprep.subr.mxu0 0.0
      %1468 = vmatpush1.msra.mxu0 0.0
      %1469 = vmatprep.mubr.f32.mxu0 0.0
      %1470 = vmatmul.mubr.f32.gmra.mrb[0].mxu0 %v1376
      %v1471 = vpop.f32.mrb[0].mxu0
      %v1472 = vadd.f32 0.0, %v1471
      %v1473 = vpop.f32.mrb[0].mxu0
      %1474 = vmatprep.mubr.f32.mxu0 0.0
      %1475 = vmatmul.mubr.f32.gmra.mrb[0].mxu0 %v1379
      %v1476 = vpop.f32.mrb[0].mxu0
      %v1477 = vadd.f32 0.0, %v1476
      %v1478 = vpop.f32.mrb[0].mxu0
      %1479 = vmatprep.mubr.f32.mxu0 0.0
      %1480 = vmatmul.mubr.f32.gmra.mrb[0].mxu0 %v1382
      %v1481 = vpop.f32.mrb[0].mxu0
      %v1482 = vadd.f32 0.0, %v1481
      %v1483 = vpop.f32.mrb[0].mxu0
      %1484 = vmatprep.mubr.f32.mxu0 0.0
      %1485 = vmatmul.mubr.f32.gmra.mrb[0].mxu0 %v1385
      %v1486 = vpop.f32.mrb[0].mxu0
      %v1487 = vadd.f32 0.0, %v1486
      %v1488 = vpop.f32.mrb[0].mxu0
      %1489 = vmatprep.mubr.f32.mxu0 0.0
      %1490 = vmatmul.mubr.f32.gmra.mrb[0].mxu0 %v1388
      %v1491 = vpop.f32.mrb[0].mxu0
      %v1492 = vadd.f32 0.0, %v1491
      %v1493 = vpop.f32.mrb[0].mxu0
      %1494 = vmatprep.mubr.f32.mxu0 0.0
      %1495 = vmatmul.mubr.f32.gmra.mrb[0].mxu0 %v1391
      %v1496 = vpop.f32.mrb[0].mxu0
      %v1497 = vadd.f32 0.0, %v1496
      %v1498 = vpop.f32.mrb[0].mxu0
      %1499 = vmatprep.mubr.f32.mxu0 0.0
      %1500 = vmatmul.mubr.f32.gmra.mrb[0].mxu0 %v1394
      %v1501 = vpop.f32.mrb[0].mxu0
      %v1502 = vadd.f32 0.0, %v1501
      %v1503 = vpop.f32.mrb[0].mxu0
      %1504 = vmatprep.mubr.f32.mxu0 0.0
      %1505 = vmatmul.mubr.f32.gmra.mrb[0].mxu0 %v1397
      %v1506 = vpop.f32.mrb[0].mxu0
      %v1507 = vadd.f32 0.0, %v1506
      %v1508 = vpop.f32.mrb[0].mxu0
      %1509 = vmatprep.mubr.f32.mxu0 0.0
      %1510 = vmatmul.mubr.f32.gmra.mrb[0].mxu0 %v1400
      %v1511 = vpop.f32.mrb[0].mxu0
      %v1512 = vadd.f32 0.0, %v1511
      %v1513 = vpop.f32.mrb[0].mxu0
      %1514 = vmatprep.mubr.f32.mxu0 0.0
      %1515 = vmatmul.mubr.f32.gmra.mrb[0].mxu0 %v1403
      %v1516 = vpop.f32.mrb[0].mxu0
      %v1517 = vadd.f32 0.0, %v1516
      %v1518 = vpop.f32.mrb[0].mxu0
      %1519 = vdwg.mxu0
      %1521 = vset.pattern.permute.xlu0 0
      %1522 = vperm.xlu0 %1521, %v1334
      %v1523 = vpop.permute.xlu0 %1522
      %1526 = vset.pattern.permute.xlu0 0
      %1527 = vperm.xlu0 %1526, %v1335
      %v1528 = vpop.permute.xlu0 %1527
      %1531 = vset.pattern.permute.xlu0 0
      %1532 = vperm.xlu0 %1531, %v1336
      %v1533 = vpop.permute.xlu0 %1532
      %1536 = vset.pattern.permute.xlu0 0
      %1537 = vperm.xlu0 %1536, %v1337
      %v1538 = vpop.permute.xlu0 %1537
      %1541 = vset.pattern.permute.xlu0 0
      %1542 = vperm.xlu0 %1541, %v1338
      %v1543 = vpop.permute.xlu0 %1542
      %1546 = vset.pattern.permute.xlu0 0
      %1547 = vperm.xlu0 %1546, %v1339
      %v1548 = vpop.permute.xlu0 %1547
      %1551 = vset.pattern.permute.xlu0 0
      %1552 = vperm.xlu0 %1551, %v1340
      %v1553 = vpop.permute.xlu0 %1552
      %1556 = vset.pattern.permute.xlu0 0
      %1557 = vperm.xlu0 %1556, %v1341
      %v1558 = vpop.permute.xlu0 %1557
      %v1560 = vadd.f32 %v1482, %v1523
      %v1561 = vadd.f32 %v1487, %v1528
      %v1562 = vadd.f32 %v1492, %v1533
      %v1563 = vadd.f32 %v1497, %v1538
      %v1564 = vadd.f32 %v1502, %v1543
      %v1565 = vadd.f32 %v1507, %v1548
      %v1566 = vadd.f32 %v1512, %v1553
      %v1567 = vadd.f32 %v1517, %v1558
      %1568 = vxpose.xlu0.b32.start [1/16] %v1472, 128
      %1569 = vxpose.xlu0.b32.cont [2/16] %v1477, 128
      %1570 = vxpose.xlu0.b32.cont [3/16] 0.0, 128
      %1571 = vxpose.xlu0.b32.cont [4/16] 0.0, 128
      %1572 = vxpose.xlu0.b32.cont [5/16] 0.0, 128
      %1573 = vxpose.xlu0.b32.cont [6/16] 0.0, 128
      %1574 = vxpose.xlu0.b32.cont [7/16] 0.0, 128
      %1575 = vxpose.xlu0.b32.cont [8/16] 0.0, 128
      %1576 = vxpose.xlu0.b32.cont [9/16] 0.0, 128
      %1577 = vxpose.xlu0.b32.cont [10/16] 0.0, 128
      %1578 = vxpose.xlu0.b32.cont [11/16] 0.0, 128
      %1579 = vxpose.xlu0.b32.cont [12/16] 0.0, 128
      %1580 = vxpose.xlu0.b32.cont [13/16] 0.0, 128
      %1581 = vxpose.xlu0.b32.cont [14/16] 0.0, 128
      %1582 = vxpose.xlu0.b32.cont [15/16] 0.0, 128
      %1583 = vxpose.xlu0.b32.end [16/16] 0.0, 128
      %v1584 = vpop.trf.xlu0
      %v1585 = vpop.trf.xlu0
      %v1586 = vpop.trf.xlu0
      %v1587 = vpop.trf.xlu0
      %v1588 = vpop.trf.xlu0
      %v1589 = vpop.trf.xlu0
      %v1590 = vpop.trf.xlu0
      %v1591 = vpop.trf.xlu0
      %v1592 = vpop.trf.xlu0
      %v1593 = vpop.trf.xlu0
      %v1594 = vpop.trf.xlu0
      %v1595 = vpop.trf.xlu0
      %v1596 = vpop.trf.xlu0
      %v1597 = vpop.trf.xlu0
      %v1598 = vpop.trf.xlu0
      %v1599 = vpop.trf.xlu0
      %vm1600 = vcmask 130048
      %v1602 = vsel %vm1600, %v1584, 0
      %v1605 = vsel %vm1600, %v1585, 0
      %v1608 = vsel %vm1600, %v1586, 0
      %v1611 = vsel %vm1600, %v1587, 0
      %1613 = vmatprep.subr.mxu0 0.0
      %1614 = vmatpush1.msra.mxu0 %v1472
      %1615 = vmatprep.subr.mxu0 0.0
      %1616 = vmatpush1.msra.mxu0 %v1477
      %1617 = vmatprep.subr.mxu0 0.0
      %1618 = vmatpush1.msra.mxu0 0.0
      %1619 = vmatprep.subr.mxu0 0.0
      %1620 = vmatpush1.msra.mxu0 0.0
      %1621 = vmatprep.subr.mxu0 0.0
      %1622 = vmatpush1.msra.mxu0 0.0
      %1623 = vmatprep.subr.mxu0 0.0
      %1624 = vmatpush1.msra.mxu0 0.0
      %1625 = vmatprep.subr.mxu0 0.0
      %1626 = vmatpush1.msra.mxu0 0.0
      %1627 = vmatprep.subr.mxu0 0.0
      %1628 = vmatpush1.msra.mxu0 0.0
      %1629 = vmatprep.subr.mxu0 0.0
      %1630 = vmatpush1.msra.mxu0 0.0
      %1631 = vmatprep.subr.mxu0 0.0
      %1632 = vmatpush1.msra.mxu0 0.0
      %1633 = vmatprep.subr.mxu0 0.0
      %1634 = vmatpush1.msra.mxu0 0.0
      %1635 = vmatprep.subr.mxu0 0.0
      %1636 = vmatpush1.msra.mxu0 0.0
      %1637 = vmatprep.subr.mxu0 0.0
      %1638 = vmatpush1.msra.mxu0 0.0
      %1639 = vmatprep.subr.mxu0 0.0
      %1640 = vmatpush1.msra.mxu0 0.0
      %1641 = vmatprep.subr.mxu0 0.0
      %1642 = vmatpush1.msra.mxu0 0.0
      %1643 = vmatprep.subr.mxu0 0.0
      %1644 = vmatpush1.msra.mxu0 0.0
      %1645 = vmatprep.subr.mxu0 0.0
      %1646 = vmatpush1.msra.mxu0 0.0
      %1647 = vmatprep.subr.mxu0 0.0
      %1648 = vmatpush1.msra.mxu0 0.0
      %1649 = vmatprep.subr.mxu0 0.0
      %1650 = vmatpush1.msra.mxu0 0.0
      %1651 = vmatprep.subr.mxu0 0.0
      %1652 = vmatpush1.msra.mxu0 0.0
      %1653 = vmatprep.subr.mxu0 0.0
      %1654 = vmatpush1.msra.mxu0 0.0
      %1655 = vmatprep.subr.mxu0 0.0
      %1656 = vmatpush1.msra.mxu0 0.0
      %1657 = vmatprep.subr.mxu0 0.0
      %1658 = vmatpush1.msra.mxu0 0.0
      %1659 = vmatprep.subr.mxu0 0.0
      %1660 = vmatpush1.msra.mxu0 0.0
      %1661 = vmatprep.subr.mxu0 0.0
      %1662 = vmatpush1.msra.mxu0 0.0
      %1663 = vmatprep.subr.mxu0 0.0
      %1664 = vmatpush1.msra.mxu0 0.0
      %1665 = vmatprep.subr.mxu0 0.0
      %1666 = vmatpush1.msra.mxu0 0.0
      %1667 = vmatprep.subr.mxu0 0.0
      %1668 = vmatpush1.msra.mxu0 0.0
      %1669 = vmatprep.subr.mxu0 0.0
      %1670 = vmatpush1.msra.mxu0 0.0
      %1671 = vmatprep.subr.mxu0 0.0
      %1672 = vmatpush1.msra.mxu0 0.0
      %1673 = vmatprep.subr.mxu0 0.0
      %1674 = vmatpush1.msra.mxu0 0.0
      %1675 = vmatprep.subr.mxu0 0.0
      %1676 = vmatpush1.msra.mxu0 0.0
      %1677 = vmatprep.mubr.f32.mxu0 0.0
      %1678 = vmatmul.mubr.f32.gmra.mrb[0].mxu0 %v1602
      %v1679 = vpop.f32.mrb[0].mxu0
      %v1680 = vadd.f32 0.0, %v1679
      %v1681 = vpop.f32.mrb[0].mxu0
      %1682 = vmatprep.mubr.f32.mxu0 0.0
      %1683 = vmatmul.mubr.f32.gmra.mrb[0].mxu0 %v1605
      %v1684 = vpop.f32.mrb[0].mxu0
      %v1685 = vadd.f32 0.0, %v1684
      %v1686 = vpop.f32.mrb[0].mxu0
      %1687 = vmatprep.mubr.f32.mxu0 0.0
      %1688 = vmatmul.mubr.f32.gmra.mrb[0].mxu0 %v1608
      %v1689 = vpop.f32.mrb[0].mxu0
      %v1690 = vadd.f32 0.0, %v1689
      %v1691 = vpop.f32.mrb[0].mxu0
      %1692 = vmatprep.mubr.f32.mxu0 0.0
      %1693 = vmatmul.mubr.f32.gmra.mrb[0].mxu0 %v1611
      %v1694 = vpop.f32.mrb[0].mxu0
      %v1695 = vadd.f32 0.0, %v1694
      %v1696 = vpop.f32.mrb[0].mxu0
      %1697 = vdwg.mxu0
      %vm1698 = vcmask 261120
      %v1699 = vsel %vm1698, %v1680, -inf
      %1700 = vmax.xlane.f32.xlu0 %v1699
      %v1701 = vpop.xlane.xlu0 %1700
      %v1702 = vsel %vm1698, %v1685, -inf
      %1703 = vmax.xlane.f32.xlu0 %v1702
      %v1704 = vpop.xlane.xlu0 %1703
      %v1705 = vsel %vm1698, %v1690, -inf
      %1706 = vmax.xlane.f32.xlu0 %v1705
      %v1707 = vpop.xlane.xlu0 %1706
      %v1708 = vsel %vm1698, %v1695, -inf
      %1709 = vmax.xlane.f32.xlu0 %v1708
      %v1710 = vpop.xlane.xlu0 %1709
      %v1711 = vsub.f32 %v1680, %v1701
      %v1712 = vsub.f32 %v1685, %v1704
      %v1713 = vsub.f32 %v1690, %v1707
      %v1714 = vsub.f32 %v1695, %v1710
      %v1715 = vmul.f32 %v1711, 1.442695
      %v1716 = vpow.pop %v1715
      %v1717 = vmul.f32 %v1712, 1.442695
      %v1718 = vpow.pop %v1717
      %v1719 = vmul.f32 %v1713, 1.442695
      %v1720 = vpow.pop %v1719
      %v1721 = vmul.f32 %v1714, 1.442695
      %v1722 = vpow.pop %v1721
      %v1723 = vsel %vm1698, %v1716, 0.0
      %1724 = vadd.xlane.f32.xlu0 %v1723
      %v1725 = vpop.xlane.xlu0 %1724
      %v1726 = vsel %vm1698, %v1718, 0.0
      %1727 = vadd.xlane.f32.xlu0 %v1726
      %v1728 = vpop.xlane.xlu0 %1727
      %v1729 = vsel %vm1698, %v1720, 0.0
      %1730 = vadd.xlane.f32.xlu0 %v1729
      %v1731 = vpop.xlane.xlu0 %1730
      %v1732 = vsel %vm1698, %v1722, 0.0
      %1733 = vadd.xlane.f32.xlu0 %v1732
      %v1734 = vpop.xlane.xlu0 %1733
      %v1735 = vrcp.pop %v1725
      %v1736 = vrcp.pop %v1728
      %v1737 = vrcp.pop %v1731
      %v1738 = vrcp.pop %v1734
      %v1739 = vmul.f32 %v1716, %v1735
      %v1740 = vmul.f32 %v1718, %v1736
      %v1741 = vmul.f32 %v1720, %v1737
      %v1742 = vmul.f32 %v1722, %v1738
      %v1743 = vsel %vm1698, %v1739, 0.0
      %v1744 = vsel %vm1698, %v1740, 0.0
      %v1745 = vadd.f32 %v1743, %v1744
      %v1746 = vsel %vm1698, %v1741, 0.0
      %v1747 = vadd.f32 %v1745, %v1746
      %v1748 = vsel %vm1698, %v1742, 0.0
      %v1749 = vadd.f32 %v1747, %v1748
      %v1750 = vrot.slane %v1749, 4
      %v1751 = vadd.f32 %v1749, %v1750
      %v1752 = vrot.slane %v1751, 2
      %v1753 = vadd.f32 %v1751, %v1752
      %v1754 = vrot.slane %v1753, 1
      %v1755 = vadd.f32 %v1753, %v1754
      %v1756 = vadd.f32 %v1755, 1e-09
      %v1757 = vrcp.pop %v1756
      %v1758 = vmul.f32 %v1739, %v1757
      %v1759 = vmul.f32 %v1740, %v1757
      %v1760 = vmul.f32 %v1741, %v1757
      %v1761 = vmul.f32 %v1742, %v1757
      %v1763 = vsel %vm1698, %v1560, 0
      %v1766 = vsel %vm1698, %v1561, 0
      %v1769 = vsel %vm1698, %v1562, 0
      %v1772 = vsel %vm1698, %v1563, 0
      %v1775 = vsel %vm1698, %v1564, 0
      %v1778 = vsel %vm1698, %v1565, 0
      %v1781 = vsel %vm1698, %v1566, 0
      %v1784 = vsel %vm1698, %v1567, 0
      %1786 = vmatprep.subr.mxu0 0.0
      %1787 = vmatpush1.msra.mxu0 %v1758
      %1788 = vmatprep.subr.mxu0 0.0
      %1789 = vmatpush1.msra.mxu0 %v1759
      %1790 = vmatprep.subr.mxu0 0.0
      %1791 = vmatpush1.msra.mxu0 %v1760
      %1792 = vmatprep.subr.mxu0 0.0
      %1793 = vmatpush1.msra.mxu0 %v1761
      %1794 = vmatprep.subr.mxu0 0.0
      %1795 = vmatpush1.msra.mxu0 0.0
      %1796 = vmatprep.subr.mxu0 0.0
      %1797 = vmatpush1.msra.mxu0 0.0
      %1798 = vmatprep.subr.mxu0 0.0
      %1799 = vmatpush1.msra.mxu0 0.0
      %1800 = vmatprep.subr.mxu0 0.0
      %1801 = vmatpush1.msra.mxu0 0.0
      %1802 = vmatprep.subr.mxu0 0.0
      %1803 = vmatpush1.msra.mxu0 0.0
      %1804 = vmatprep.subr.mxu0 0.0
      %1805 = vmatpush1.msra.mxu0 0.0
      %1806 = vmatprep.subr.mxu0 0.0
      %1807 = vmatpush1.msra.mxu0 0.0
      %1808 = vmatprep.subr.mxu0 0.0
      %1809 = vmatpush1.msra.mxu0 0.0
      %1810 = vmatprep.subr.mxu0 0.0
      %1811 = vmatpush1.msra.mxu0 0.0
      %1812 = vmatprep.subr.mxu0 0.0
      %1813 = vmatpush1.msra.mxu0 0.0
      %1814 = vmatprep.subr.mxu0 0.0
      %1815 = vmatpush1.msra.mxu0 0.0
      %1816 = vmatprep.subr.mxu0 0.0
      %1817 = vmatpush1.msra.mxu0 0.0
      %1818 = vmatprep.subr.mxu0 0.0
      %1819 = vmatpush1.msra.mxu0 0.0
      %1820 = vmatprep.subr.mxu0 0.0
      %1821 = vmatpush1.msra.mxu0 0.0
      %1822 = vmatprep.subr.mxu0 0.0
      %1823 = vmatpush1.msra.mxu0 0.0
      %1824 = vmatprep.subr.mxu0 0.0
      %1825 = vmatpush1.msra.mxu0 0.0
      %1826 = vmatprep.subr.mxu0 0.0
      %1827 = vmatpush1.msra.mxu0 0.0
      %1828 = vmatprep.subr.mxu0 0.0
      %1829 = vmatpush1.msra.mxu0 0.0
      %1830 = vmatprep.subr.mxu0 0.0
      %1831 = vmatpush1.msra.mxu0 0.0
      %1832 = vmatprep.subr.mxu0 0.0
      %1833 = vmatpush1.msra.mxu0 0.0
      %1834 = vmatprep.subr.mxu0 0.0
      %1835 = vmatpush1.msra.mxu0 0.0
      %1836 = vmatprep.subr.mxu0 0.0
      %1837 = vmatpush1.msra.mxu0 0.0
      %1838 = vmatprep.subr.mxu0 0.0
      %1839 = vmatpush1.msra.mxu0 0.0
      %1840 = vmatprep.subr.mxu0 0.0
      %1841 = vmatpush1.msra.mxu0 0.0
      %1842 = vmatprep.subr.mxu0 0.0
      %1843 = vmatpush1.msra.mxu0 0.0
      %1844 = vmatprep.subr.mxu0 0.0
      %1845 = vmatpush1.msra.mxu0 0.0
      %1846 = vmatprep.subr.mxu0 0.0
      %1847 = vmatpush1.msra.mxu0 0.0
      %1848 = vmatprep.subr.mxu0 0.0
      %1849 = vmatpush1.msra.mxu0 0.0
      %1850 = vmatprep.mubr.f32.mxu0 0.0
      %1851 = vmatmul.mubr.f32.gmra.mrb[0].mxu0 %v1763
      %v1852 = vpop.f32.mrb[0].mxu0
      %v1853 = vadd.f32 0.0, %v1852
      %v1854 = vpop.f32.mrb[0].mxu0
      %1855 = vmatprep.mubr.f32.mxu0 0.0
      %1856 = vmatmul.mubr.f32.gmra.mrb[0].mxu0 %v1766
      %v1857 = vpop.f32.mrb[0].mxu0
      %v1858 = vadd.f32 0.0, %v1857
      %v1859 = vpop.f32.mrb[0].mxu0
      %1860 = vmatprep.mubr.f32.mxu0 0.0
      %1861 = vmatmul.mubr.f32.gmra.mrb[0].mxu0 %v1769
      %v1862 = vpop.f32.mrb[0].mxu0
      %v1863 = vadd.f32 0.0, %v1862
      %v1864 = vpop.f32.mrb[0].mxu0
      %1865 = vmatprep.mubr.f32.mxu0 0.0
      %1866 = vmatmul.mubr.f32.gmra.mrb[0].mxu0 %v1772
      %v1867 = vpop.f32.mrb[0].mxu0
      %v1868 = vadd.f32 0.0, %v1867
      %v1869 = vpop.f32.mrb[0].mxu0
      %1870 = vmatprep.mubr.f32.mxu0 0.0
      %1871 = vmatmul.mubr.f32.gmra.mrb[0].mxu0 %v1775
      %v1872 = vpop.f32.mrb[0].mxu0
      %v1873 = vadd.f32 0.0, %v1872
      %v1874 = vpop.f32.mrb[0].mxu0
      %1875 = vmatprep.mubr.f32.mxu0 0.0
      %1876 = vmatmul.mubr.f32.gmra.mrb[0].mxu0 %v1778
      %v1877 = vpop.f32.mrb[0].mxu0
      %v1878 = vadd.f32 0.0, %v1877
      %v1879 = vpop.f32.mrb[0].mxu0
      %1880 = vmatprep.mubr.f32.mxu0 0.0
      %1881 = vmatmul.mubr.f32.gmra.mrb[0].mxu0 %v1781
      %v1882 = vpop.f32.mrb[0].mxu0
      %v1883 = vadd.f32 0.0, %v1882
      %v1884 = vpop.f32.mrb[0].mxu0
      %1885 = vmatprep.mubr.f32.mxu0 0.0
      %1886 = vmatmul.mubr.f32.gmra.mrb[0].mxu0 %v1784
      %v1887 = vpop.f32.mrb[0].mxu0
      %v1888 = vadd.f32 0.0, %v1887
      %v1889 = vpop.f32.mrb[0].mxu0
      %1890 = vdwg.mxu0
      %1893 = vrot.lane.b32.xlu0 %v1472, 96
      %v1894 = vpop.permute.xlu0 %1893
      %1895 = vrot.lane.b32.xlu0 %v1477, 96
      %v1896 = vpop.permute.xlu0 %1895
      %1899 = vxpose.xlu0.b32.start [1/16] %v1894, 128
      %1900 = vxpose.xlu0.b32.cont [2/16] %v1896, 128
      %1901 = vxpose.xlu0.b32.cont [3/16] 0.0, 128
      %1902 = vxpose.xlu0.b32.cont [4/16] 0.0, 128
      %1903 = vxpose.xlu0.b32.cont [5/16] 0.0, 128
      %1904 = vxpose.xlu0.b32.cont [6/16] 0.0, 128
      %1905 = vxpose.xlu0.b32.cont [7/16] 0.0, 128
      %1906 = vxpose.xlu0.b32.cont [8/16] 0.0, 128
      %1907 = vxpose.xlu0.b32.cont [9/16] 0.0, 128
      %1908 = vxpose.xlu0.b32.cont [10/16] 0.0, 128
      %1909 = vxpose.xlu0.b32.cont [11/16] 0.0, 128
      %1910 = vxpose.xlu0.b32.cont [12/16] 0.0, 128
      %1911 = vxpose.xlu0.b32.cont [13/16] 0.0, 128
      %1912 = vxpose.xlu0.b32.cont [14/16] 0.0, 128
      %1913 = vxpose.xlu0.b32.cont [15/16] 0.0, 128
      %1914 = vxpose.xlu0.b32.end [16/16] 0.0, 128
      %v1915 = vpop.trf.xlu0
      %v1916 = vpop.trf.xlu0
      %v1917 = vpop.trf.xlu0
      %v1918 = vpop.trf.xlu0
      %v1919 = vpop.trf.xlu0
      %v1920 = vpop.trf.xlu0
      %v1921 = vpop.trf.xlu0
      %v1922 = vpop.trf.xlu0
      %v1923 = vpop.trf.xlu0
      %v1924 = vpop.trf.xlu0
      %v1925 = vpop.trf.xlu0
      %v1926 = vpop.trf.xlu0
      %v1927 = vpop.trf.xlu0
      %v1928 = vpop.trf.xlu0
      %v1929 = vpop.trf.xlu0
      %v1930 = vpop.trf.xlu0
      %v1932 = vsel %vm1600, %v1915, 0
      %v1935 = vsel %vm1600, %v1916, 0
      %v1938 = vsel %vm1600, %v1917, 0
      %v1941 = vsel %vm1600, %v1918, 0
      %1943 = vmatprep.subr.mxu0 0.0
      %1944 = vmatpush1.msra.mxu0 %v1894
      %1945 = vmatprep.subr.mxu0 0.0
      %1946 = vmatpush1.msra.mxu0 %v1896
      %1947 = vmatprep.subr.mxu0 0.0
      %1948 = vmatpush1.msra.mxu0 0.0
      %1949 = vmatprep.subr.mxu0 0.0
      %1950 = vmatpush1.msra.mxu0 0.0
      %1951 = vmatprep.subr.mxu0 0.0
      %1952 = vmatpush1.msra.mxu0 0.0
      %1953 = vmatprep.subr.mxu0 0.0
      %1954 = vmatpush1.msra.mxu0 0.0
      %1955 = vmatprep.subr.mxu0 0.0
      %1956 = vmatpush1.msra.mxu0 0.0
      %1957 = vmatprep.subr.mxu0 0.0
      %1958 = vmatpush1.msra.mxu0 0.0
      %1959 = vmatprep.subr.mxu0 0.0
      %1960 = vmatpush1.msra.mxu0 0.0
      %1961 = vmatprep.subr.mxu0 0.0
      %1962 = vmatpush1.msra.mxu0 0.0
      %1963 = vmatprep.subr.mxu0 0.0
      %1964 = vmatpush1.msra.mxu0 0.0
      %1965 = vmatprep.subr.mxu0 0.0
      %1966 = vmatpush1.msra.mxu0 0.0
      %1967 = vmatprep.subr.mxu0 0.0
      %1968 = vmatpush1.msra.mxu0 0.0
      %1969 = vmatprep.subr.mxu0 0.0
      %1970 = vmatpush1.msra.mxu0 0.0
      %1971 = vmatprep.subr.mxu0 0.0
      %1972 = vmatpush1.msra.mxu0 0.0
      %1973 = vmatprep.subr.mxu0 0.0
      %1974 = vmatpush1.msra.mxu0 0.0
      %1975 = vmatprep.subr.mxu0 0.0
      %1976 = vmatpush1.msra.mxu0 0.0
      %1977 = vmatprep.subr.mxu0 0.0
      %1978 = vmatpush1.msra.mxu0 0.0
      %1979 = vmatprep.subr.mxu0 0.0
      %1980 = vmatpush1.msra.mxu0 0.0
      %1981 = vmatprep.subr.mxu0 0.0
      %1982 = vmatpush1.msra.mxu0 0.0
      %1983 = vmatprep.subr.mxu0 0.0
      %1984 = vmatpush1.msra.mxu0 0.0
      %1985 = vmatprep.subr.mxu0 0.0
      %1986 = vmatpush1.msra.mxu0 0.0
      %1987 = vmatprep.subr.mxu0 0.0
      %1988 = vmatpush1.msra.mxu0 0.0
      %1989 = vmatprep.subr.mxu0 0.0
      %1990 = vmatpush1.msra.mxu0 0.0
      %1991 = vmatprep.subr.mxu0 0.0
      %1992 = vmatpush1.msra.mxu0 0.0
      %1993 = vmatprep.subr.mxu0 0.0
      %1994 = vmatpush1.msra.mxu0 0.0
      %1995 = vmatprep.subr.mxu0 0.0
      %1996 = vmatpush1.msra.mxu0 0.0
      %1997 = vmatprep.subr.mxu0 0.0
      %1998 = vmatpush1.msra.mxu0 0.0
      %1999 = vmatprep.subr.mxu0 0.0
      %2000 = vmatpush1.msra.mxu0 0.0
      %2001 = vmatprep.subr.mxu0 0.0
      %2002 = vmatpush1.msra.mxu0 0.0
      %2003 = vmatprep.subr.mxu0 0.0
      %2004 = vmatpush1.msra.mxu0 0.0
      %2005 = vmatprep.subr.mxu0 0.0
      %2006 = vmatpush1.msra.mxu0 0.0
      %2007 = vmatprep.mubr.f32.mxu0 0.0
      %2008 = vmatmul.mubr.f32.gmra.mrb[0].mxu0 %v1932
      %v2009 = vpop.f32.mrb[0].mxu0
      %v2010 = vadd.f32 0.0, %v2009
      %v2011 = vpop.f32.mrb[0].mxu0
      %2012 = vmatprep.mubr.f32.mxu0 0.0
      %2013 = vmatmul.mubr.f32.gmra.mrb[0].mxu0 %v1935
      %v2014 = vpop.f32.mrb[0].mxu0
      %v2015 = vadd.f32 0.0, %v2014
      %v2016 = vpop.f32.mrb[0].mxu0
      %2017 = vmatprep.mubr.f32.mxu0 0.0
      %2018 = vmatmul.mubr.f32.gmra.mrb[0].mxu0 %v1938
      %v2019 = vpop.f32.mrb[0].mxu0
      %v2020 = vadd.f32 0.0, %v2019
      %v2021 = vpop.f32.mrb[0].mxu0
      %2022 = vmatprep.mubr.f32.mxu0 0.0
      %2023 = vmatmul.mubr.f32.gmra.mrb[0].mxu0 %v1941
      %v2024 = vpop.f32.mrb[0].mxu0
      %v2025 = vadd.f32 0.0, %v2024
      %v2026 = vpop.f32.mrb[0].mxu0
      %2027 = vdwg.mxu0
      %v2028 = vsel %vm1698, %v2010, -inf
      %2029 = vmax.xlane.f32.xlu0 %v2028
      %v2030 = vpop.xlane.xlu0 %2029
      %v2031 = vsel %vm1698, %v2015, -inf
      %2032 = vmax.xlane.f32.xlu0 %v2031
      %v2033 = vpop.xlane.xlu0 %2032
      %v2034 = vsel %vm1698, %v2020, -inf
      %2035 = vmax.xlane.f32.xlu0 %v2034
      %v2036 = vpop.xlane.xlu0 %2035
      %v2037 = vsel %vm1698, %v2025, -inf
      %2038 = vmax.xlane.f32.xlu0 %v2037
      %v2039 = vpop.xlane.xlu0 %2038
      %v2040 = vsub.f32 %v2010, %v2030
      %v2041 = vsub.f32 %v2015, %v2033
      %v2042 = vsub.f32 %v2020, %v2036
      %v2043 = vsub.f32 %v2025, %v2039
      %v2044 = vmul.f32 %v2040, 1.442695
      %v2045 = vpow.pop %v2044
      %v2046 = vmul.f32 %v2041, 1.442695
      %v2047 = vpow.pop %v2046
      %v2048 = vmul.f32 %v2042, 1.442695
      %v2049 = vpow.pop %v2048
      %v2050 = vmul.f32 %v2043, 1.442695
      %v2051 = vpow.pop %v2050
      %v2052 = vsel %vm1698, %v2045, 0.0
      %2053 = vadd.xlane.f32.xlu0 %v2052
      %v2054 = vpop.xlane.xlu0 %2053
      %v2055 = vsel %vm1698, %v2047, 0.0
      %2056 = vadd.xlane.f32.xlu0 %v2055
      %v2057 = vpop.xlane.xlu0 %2056
      %v2058 = vsel %vm1698, %v2049, 0.0
      %2059 = vadd.xlane.f32.xlu0 %v2058
      %v2060 = vpop.xlane.xlu0 %2059
      %v2061 = vsel %vm1698, %v2051, 0.0
      %2062 = vadd.xlane.f32.xlu0 %v2061
      %v2063 = vpop.xlane.xlu0 %2062
      %v2064 = vrcp.pop %v2054
      %v2065 = vrcp.pop %v2057
      %v2066 = vrcp.pop %v2060
      %v2067 = vrcp.pop %v2063
      %v2068 = vmul.f32 %v2045, %v2064
      %v2069 = vmul.f32 %v2047, %v2065
      %v2070 = vmul.f32 %v2049, %v2066
      %v2071 = vmul.f32 %v2051, %v2067
      %v2072 = vsel %vm1698, %v2068, 0.0
      %v2073 = vsel %vm1698, %v2069, 0.0
      %v2074 = vadd.f32 %v2072, %v2073
      %v2075 = vsel %vm1698, %v2070, 0.0
      %v2076 = vadd.f32 %v2074, %v2075
      %v2077 = vsel %vm1698, %v2071, 0.0
      %v2078 = vadd.f32 %v2076, %v2077
      %v2079 = vrot.slane %v2078, 4
      %v2080 = vadd.f32 %v2078, %v2079
      %v2081 = vrot.slane %v2080, 2
      %v2082 = vadd.f32 %v2080, %v2081
      %v2083 = vrot.slane %v2082, 1
      %v2084 = vadd.f32 %v2082, %v2083
      %v2085 = vadd.f32 %v2084, 1e-09
      %v2086 = vrcp.pop %v2085
      %v2087 = vmul.f32 %v2068, %v2086
      %v2088 = vmul.f32 %v2069, %v2086
      %v2089 = vmul.f32 %v2070, %v2086
      %v2090 = vmul.f32 %v2071, %v2086
      %2091 = vrot.lane.b32.xlu0 %v1560, 96
      %v2092 = vpop.permute.xlu0 %2091
      %2093 = vrot.lane.b32.xlu0 %v1561, 96
      %v2094 = vpop.permute.xlu0 %2093
      %2095 = vrot.lane.b32.xlu0 %v1562, 96
      %v2096 = vpop.permute.xlu0 %2095
      %2097 = vrot.lane.b32.xlu0 %v1563, 96
      %v2098 = vpop.permute.xlu0 %2097
      %2099 = vrot.lane.b32.xlu0 %v1564, 96
      %v2100 = vpop.permute.xlu0 %2099
      %2101 = vrot.lane.b32.xlu0 %v1565, 96
      %v2102 = vpop.permute.xlu0 %2101
      %2103 = vrot.lane.b32.xlu0 %v1566, 96
      %v2104 = vpop.permute.xlu0 %2103
      %2105 = vrot.lane.b32.xlu0 %v1567, 96
      %v2106 = vpop.permute.xlu0 %2105
      %v2107 = vsel %vm1698, %v2092, 0
      %v2109 = vsel %vm1698, %v2094, 0
      %v2111 = vsel %vm1698, %v2096, 0
      %v2113 = vsel %vm1698, %v2098, 0
      %v2115 = vsel %vm1698, %v2100, 0
      %v2117 = vsel %vm1698, %v2102, 0
      %v2119 = vsel %vm1698, %v2104, 0
      %v2121 = vsel %vm1698, %v2106, 0
      %2123 = vmatprep.subr.mxu0 0.0
      %2124 = vmatpush1.msra.mxu0 %v2087
      %2125 = vmatprep.subr.mxu0 0.0
      %2126 = vmatpush1.msra.mxu0 %v2088
      %2127 = vmatprep.subr.mxu0 0.0
      %2128 = vmatpush1.msra.mxu0 %v2089
      %2129 = vmatprep.subr.mxu0 0.0
      %2130 = vmatpush1.msra.mxu0 %v2090
      %2131 = vmatprep.subr.mxu0 0.0
      %2132 = vmatpush1.msra.mxu0 0.0
      %2133 = vmatprep.subr.mxu0 0.0
      %2134 = vmatpush1.msra.mxu0 0.0
      %2135 = vmatprep.subr.mxu0 0.0
      %2136 = vmatpush1.msra.mxu0 0.0
      %2137 = vmatprep.subr.mxu0 0.0
      %2138 = vmatpush1.msra.mxu0 0.0
      %2139 = vmatprep.subr.mxu0 0.0
      %2140 = vmatpush1.msra.mxu0 0.0
      %2141 = vmatprep.subr.mxu0 0.0
      %2142 = vmatpush1.msra.mxu0 0.0
      %2143 = vmatprep.subr.mxu0 0.0
      %2144 = vmatpush1.msra.mxu0 0.0
      %2145 = vmatprep.subr.mxu0 0.0
      %2146 = vmatpush1.msra.mxu0 0.0
      %2147 = vmatprep.subr.mxu0 0.0
      %2148 = vmatpush1.msra.mxu0 0.0
      %2149 = vmatprep.subr.mxu0 0.0
      %2150 = vmatpush1.msra.mxu0 0.0
      %2151 = vmatprep.subr.mxu0 0.0
      %2152 = vmatpush1.msra.mxu0 0.0
      %2153 = vmatprep.subr.mxu0 0.0
      %2154 = vmatpush1.msra.mxu0 0.0
      %2155 = vmatprep.subr.mxu0 0.0
      %2156 = vmatpush1.msra.mxu0 0.0
      %2157 = vmatprep.subr.mxu0 0.0
      %2158 = vmatpush1.msra.mxu0 0.0
      %2159 = vmatprep.subr.mxu0 0.0
      %2160 = vmatpush1.msra.mxu0 0.0
      %2161 = vmatprep.subr.mxu0 0.0
      %2162 = vmatpush1.msra.mxu0 0.0
      %2163 = vmatprep.subr.mxu0 0.0
      %2164 = vmatpush1.msra.mxu0 0.0
      %2165 = vmatprep.subr.mxu0 0.0
      %2166 = vmatpush1.msra.mxu0 0.0
      %2167 = vmatprep.subr.mxu0 0.0
      %2168 = vmatpush1.msra.mxu0 0.0
      %2169 = vmatprep.subr.mxu0 0.0
      %2170 = vmatpush1.msra.mxu0 0.0
      %2171 = vmatprep.subr.mxu0 0.0
      %2172 = vmatpush1.msra.mxu0 0.0
      %2173 = vmatprep.subr.mxu0 0.0
      %2174 = vmatpush1.msra.mxu0 0.0
      %2175 = vmatprep.subr.mxu0 0.0
      %2176 = vmatpush1.msra.mxu0 0.0
      %2177 = vmatprep.subr.mxu0 0.0
      %2178 = vmatpush1.msra.mxu0 0.0
      %2179 = vmatprep.subr.mxu0 0.0
      %2180 = vmatpush1.msra.mxu0 0.0
      %2181 = vmatprep.subr.mxu0 0.0
      %2182 = vmatpush1.msra.mxu0 0.0
      %2183 = vmatprep.subr.mxu0 0.0
      %2184 = vmatpush1.msra.mxu0 0.0
      %2185 = vmatprep.subr.mxu0 0.0
      %2186 = vmatpush1.msra.mxu0 0.0
      %2187 = vmatprep.mubr.f32.mxu0 0.0
      %2188 = vmatmul.mubr.f32.gmra.mrb[0].mxu0 %v2107
      %v2189 = vpop.f32.mrb[0].mxu0
      %v2190 = vadd.f32 0.0, %v2189
      %v2191 = vpop.f32.mrb[0].mxu0
      %2192 = vmatprep.mubr.f32.mxu0 0.0
      %2193 = vmatmul.mubr.f32.gmra.mrb[0].mxu0 %v2109
      %v2194 = vpop.f32.mrb[0].mxu0
      %v2195 = vadd.f32 0.0, %v2194
      %v2196 = vpop.f32.mrb[0].mxu0
      %2197 = vmatprep.mubr.f32.mxu0 0.0
      %2198 = vmatmul.mubr.f32.gmra.mrb[0].mxu0 %v2111
      %v2199 = vpop.f32.mrb[0].mxu0
      %v2200 = vadd.f32 0.0, %v2199
      %v2201 = vpop.f32.mrb[0].mxu0
      %2202 = vmatprep.mubr.f32.mxu0 0.0
      %2203 = vmatmul.mubr.f32.gmra.mrb[0].mxu0 %v2113
      %v2204 = vpop.f32.mrb[0].mxu0
      %v2205 = vadd.f32 0.0, %v2204
      %v2206 = vpop.f32.mrb[0].mxu0
      %2207 = vmatprep.mubr.f32.mxu0 0.0
      %2208 = vmatmul.mubr.f32.gmra.mrb[0].mxu0 %v2115
      %v2209 = vpop.f32.mrb[0].mxu0
      %v2210 = vadd.f32 0.0, %v2209
      %v2211 = vpop.f32.mrb[0].mxu0
      %2212 = vmatprep.mubr.f32.mxu0 0.0
      %2213 = vmatmul.mubr.f32.gmra.mrb[0].mxu0 %v2117
      %v2214 = vpop.f32.mrb[0].mxu0
      %v2215 = vadd.f32 0.0, %v2214
      %v2216 = vpop.f32.mrb[0].mxu0
      %2217 = vmatprep.mubr.f32.mxu0 0.0
      %2218 = vmatmul.mubr.f32.gmra.mrb[0].mxu0 %v2119
      %v2219 = vpop.f32.mrb[0].mxu0
      %v2220 = vadd.f32 0.0, %v2219
      %v2221 = vpop.f32.mrb[0].mxu0
      %2222 = vmatprep.mubr.f32.mxu0 0.0
      %2223 = vmatmul.mubr.f32.gmra.mrb[0].mxu0 %v2121
      %v2224 = vpop.f32.mrb[0].mxu0
      %v2225 = vadd.f32 0.0, %v2224
      %v2226 = vpop.f32.mrb[0].mxu0
      %2227 = vdwg.mxu0
      %2236 = vrot.lane.b32.xlu0 %v2190, 32
      %v2237 = vpop.permute.xlu0 %2236
      %2238 = vrot.lane.b32.xlu0 %v2195, 32
      %v2239 = vpop.permute.xlu0 %2238
      %2240 = vrot.lane.b32.xlu0 %v2200, 32
      %v2241 = vpop.permute.xlu0 %2240
      %2242 = vrot.lane.b32.xlu0 %v2205, 32
      %v2243 = vpop.permute.xlu0 %2242
      %2244 = vrot.lane.b32.xlu0 %v2210, 32
      %v2245 = vpop.permute.xlu0 %2244
      %2246 = vrot.lane.b32.xlu0 %v2215, 32
      %v2247 = vpop.permute.xlu0 %2246
      %2248 = vrot.lane.b32.xlu0 %v2220, 32
      %v2249 = vpop.permute.xlu0 %2248
      %2250 = vrot.lane.b32.xlu0 %v2225, 32
      %v2251 = vpop.permute.xlu0 %2250
      %v2260 = vsel %vm1698, %v1853, %v2237
      %v2261 = vsel %vm1698, %v1858, %v2239
      %v2262 = vsel %vm1698, %v1863, %v2241
      %v2263 = vsel %vm1698, %v1868, %v2243
      %v2264 = vsel %vm1698, %v1873, %v2245
      %v2265 = vsel %vm1698, %v1878, %v2247
      %v2266 = vsel %vm1698, %v1883, %v2249
      %v2267 = vsel %vm1698, %v1888, %v2251
      %v2268 = vsub.f32 %v1316, %v2260
      %v2269 = vsub.f32 %v1317, %v2261
      %v2270 = vsub.f32 %v1318, %v2262
      %v2271 = vsub.f32 %v1319, %v2263
      %v2272 = vsub.f32 %v1320, %v2264
      %v2273 = vsub.f32 %v1321, %v2265
      %v2274 = vsub.f32 %v1322, %v2266
      %v2275 = vsub.f32 %v1323, %v2267
      %2277 = vset.pattern.permute.xlu0 0
      %2278 = vperm.xlu0 %2277, %v1350
      %v2279 = vpop.permute.xlu0 %2278
      %2282 = vset.pattern.permute.xlu0 0
      %2283 = vperm.xlu0 %2282, %v1351
      %v2284 = vpop.permute.xlu0 %2283
      %2287 = vset.pattern.permute.xlu0 0
      %2288 = vperm.xlu0 %2287, %v1352
      %v2289 = vpop.permute.xlu0 %2288
      %2292 = vset.pattern.permute.xlu0 0
      %2293 = vperm.xlu0 %2292, %v1353
      %v2294 = vpop.permute.xlu0 %2293
      %2297 = vset.pattern.permute.xlu0 0
      %2298 = vperm.xlu0 %2297, %v1354
      %v2299 = vpop.permute.xlu0 %2298
      %2302 = vset.pattern.permute.xlu0 0
      %2303 = vperm.xlu0 %2302, %v1355
      %v2304 = vpop.permute.xlu0 %2303
      %2307 = vset.pattern.permute.xlu0 0
      %2308 = vperm.xlu0 %2307, %v1356
      %v2309 = vpop.permute.xlu0 %2308
      %2312 = vset.pattern.permute.xlu0 0
      %2313 = vperm.xlu0 %2312, %v1357
      %v2314 = vpop.permute.xlu0 %2313
      %v2317 = vsel %vm1374, %v1342, 0
      %v2320 = vsel %vm1374, %v1343, 0
      %v2323 = vsel %vm1374, %v1344, 0
      %v2326 = vsel %vm1374, %v1345, 0
      %v2329 = vsel %vm1374, %v1346, 0
      %v2332 = vsel %vm1374, %v1347, 0
      %v2335 = vsel %vm1374, %v1348, 0
      %v2338 = vsel %vm1374, %v1349, 0
      %2340 = vmatprep.subr.mxu0 0.0
      %2341 = vmatpush1.msra.mxu0 %v2268
      %2342 = vmatprep.subr.mxu0 0.0
      %2343 = vmatpush1.msra.mxu0 %v2269
      %2344 = vmatprep.subr.mxu0 0.0
      %2345 = vmatpush1.msra.mxu0 %v2270
      %2346 = vmatprep.subr.mxu0 0.0
      %2347 = vmatpush1.msra.mxu0 %v2271
      %2348 = vmatprep.subr.mxu0 0.0
      %2349 = vmatpush1.msra.mxu0 %v2272
      %2350 = vmatprep.subr.mxu0 0.0
      %2351 = vmatpush1.msra.mxu0 %v2273
      %2352 = vmatprep.subr.mxu0 0.0
      %2353 = vmatpush1.msra.mxu0 %v2274
      %2354 = vmatprep.subr.mxu0 0.0
      %2355 = vmatpush1.msra.mxu0 %v2275
      %2356 = vmatprep.subr.mxu0 0.0
      %2357 = vmatpush1.msra.mxu0 0.0
      %2358 = vmatprep.subr.mxu0 0.0
      %2359 = vmatpush1.msra.mxu0 0.0
      %2360 = vmatprep.subr.mxu0 0.0
      %2361 = vmatpush1.msra.mxu0 0.0
      %2362 = vmatprep.subr.mxu0 0.0
      %2363 = vmatpush1.msra.mxu0 0.0
      %2364 = vmatprep.subr.mxu0 0.0
      %2365 = vmatpush1.msra.mxu0 0.0
      %2366 = vmatprep.subr.mxu0 0.0
      %2367 = vmatpush1.msra.mxu0 0.0
      %2368 = vmatprep.subr.mxu0 0.0
      %2369 = vmatpush1.msra.mxu0 0.0
      %2370 = vmatprep.subr.mxu0 0.0
      %2371 = vmatpush1.msra.mxu0 0.0
      %2372 = vmatprep.subr.mxu0 0.0
      %2373 = vmatpush1.msra.mxu0 0.0
      %2374 = vmatprep.subr.mxu0 0.0
      %2375 = vmatpush1.msra.mxu0 0.0
      %2376 = vmatprep.subr.mxu0 0.0
      %2377 = vmatpush1.msra.mxu0 0.0
      %2378 = vmatprep.subr.mxu0 0.0
      %2379 = vmatpush1.msra.mxu0 0.0
      %2380 = vmatprep.subr.mxu0 0.0
      %2381 = vmatpush1.msra.mxu0 0.0
      %2382 = vmatprep.subr.mxu0 0.0
      %2383 = vmatpush1.msra.mxu0 0.0
      %2384 = vmatprep.subr.mxu0 0.0
      %2385 = vmatpush1.msra.mxu0 0.0
      %2386 = vmatprep.subr.mxu0 0.0
      %2387 = vmatpush1.msra.mxu0 0.0
      %2388 = vmatprep.subr.mxu0 0.0
      %2389 = vmatpush1.msra.mxu0 0.0
      %2390 = vmatprep.subr.mxu0 0.0
      %2391 = vmatpush1.msra.mxu0 0.0
      %2392 = vmatprep.subr.mxu0 0.0
      %2393 = vmatpush1.msra.mxu0 0.0
      %2394 = vmatprep.subr.mxu0 0.0
      %2395 = vmatpush1.msra.mxu0 0.0
      %2396 = vmatprep.subr.mxu0 0.0
      %2397 = vmatpush1.msra.mxu0 0.0
      %2398 = vmatprep.subr.mxu0 0.0
      %2399 = vmatpush1.msra.mxu0 0.0
      %2400 = vmatprep.subr.mxu0 0.0
      %2401 = vmatpush1.msra.mxu0 0.0
      %2402 = vmatprep.subr.mxu0 0.0
      %2403 = vmatpush1.msra.mxu0 0.0
      %2404 = vmatprep.mubr.f32.mxu0 0.0
      %2405 = vmatmul.mubr.f32.gmra.mrb[0].mxu0 %v2317
      %v2406 = vpop.f32.mrb[0].mxu0
      %v2407 = vadd.f32 %v2279, %v2406
      %v2408 = vpop.f32.mrb[0].mxu0
      %2409 = vmatprep.mubr.f32.mxu0 0.0
      %2410 = vmatmul.mubr.f32.gmra.mrb[0].mxu0 %v2320
      %v2411 = vpop.f32.mrb[0].mxu0
      %v2412 = vadd.f32 %v2284, %v2411
      %v2413 = vpop.f32.mrb[0].mxu0
      %2414 = vmatprep.mubr.f32.mxu0 0.0
      %2415 = vmatmul.mubr.f32.gmra.mrb[0].mxu0 %v2323
      %v2416 = vpop.f32.mrb[0].mxu0
      %v2417 = vadd.f32 %v2289, %v2416
      %v2418 = vpop.f32.mrb[0].mxu0
      %2419 = vmatprep.mubr.f32.mxu0 0.0
      %2420 = vmatmul.mubr.f32.gmra.mrb[0].mxu0 %v2326
      %v2421 = vpop.f32.mrb[0].mxu0
      %v2422 = vadd.f32 %v2294, %v2421
      %v2423 = vpop.f32.mrb[0].mxu0
      %2424 = vmatprep.mubr.f32.mxu0 0.0
      %2425 = vmatmul.mubr.f32.gmra.mrb[0].mxu0 %v2329
      %v2426 = vpop.f32.mrb[0].mxu0
      %v2427 = vadd.f32 %v2299, %v2426
      %v2428 = vpop.f32.mrb[0].mxu0
      %2429 = vmatprep.mubr.f32.mxu0 0.0
      %2430 = vmatmul.mubr.f32.gmra.mrb[0].mxu0 %v2332
      %v2431 = vpop.f32.mrb[0].mxu0
      %v2432 = vadd.f32 %v2304, %v2431
      %v2433 = vpop.f32.mrb[0].mxu0
      %2434 = vmatprep.mubr.f32.mxu0 0.0
      %2435 = vmatmul.mubr.f32.gmra.mrb[0].mxu0 %v2335
      %v2436 = vpop.f32.mrb[0].mxu0
      %v2437 = vadd.f32 %v2309, %v2436
      %v2438 = vpop.f32.mrb[0].mxu0
      %2439 = vmatprep.mubr.f32.mxu0 0.0
      %2440 = vmatmul.mubr.f32.gmra.mrb[0].mxu0 %v2338
      %v2441 = vpop.f32.mrb[0].mxu0
      %v2442 = vadd.f32 %v2314, %v2441
      %v2443 = vpop.f32.mrb[0].mxu0
      %2444 = vdwg.mxu0
      %v2445 = vsel %vm1374, %v2407, 0.0
      %2446 = vadd.xlane.f32.xlu0 %v2445
      %v2447 = vpop.xlane.xlu0 %2446
      %v2448 = vsel %vm1374, %v2412, 0.0
      %2449 = vadd.xlane.f32.xlu0 %v2448
      %v2450 = vpop.xlane.xlu0 %2449
      %v2451 = vsel %vm1374, %v2417, 0.0
      %2452 = vadd.xlane.f32.xlu0 %v2451
      %v2453 = vpop.xlane.xlu0 %2452
      %v2454 = vsel %vm1374, %v2422, 0.0
      %2455 = vadd.xlane.f32.xlu0 %v2454
      %v2456 = vpop.xlane.xlu0 %2455
      %v2457 = vsel %vm1374, %v2427, 0.0
      %2458 = vadd.xlane.f32.xlu0 %v2457
      %v2459 = vpop.xlane.xlu0 %2458
      %v2460 = vsel %vm1374, %v2432, 0.0
      %2461 = vadd.xlane.f32.xlu0 %v2460
      %v2462 = vpop.xlane.xlu0 %2461
      %v2463 = vsel %vm1374, %v2437, 0.0
      %2464 = vadd.xlane.f32.xlu0 %v2463
      %v2465 = vpop.xlane.xlu0 %2464
      %v2466 = vsel %vm1374, %v2442, 0.0
      %2467 = vadd.xlane.f32.xlu0 %v2466
      %v2468 = vpop.xlane.xlu0 %2467
      %v2469 = vmul.f32 %v2407, %v2407
      %v2470 = vmul.f32 %v2412, %v2412
      %v2471 = vmul.f32 %v2417, %v2417
      %v2472 = vmul.f32 %v2422, %v2422
      %v2473 = vmul.f32 %v2427, %v2427
      %v2474 = vmul.f32 %v2432, %v2432
      %v2475 = vmul.f32 %v2437, %v2437
      %v2476 = vmul.f32 %v2442, %v2442
      %v2477 = vsel %vm1374, %v2469, 0.0
      %2478 = vadd.xlane.f32.xlu0 %v2477
      %v2479 = vpop.xlane.xlu0 %2478
      %v2480 = vsel %vm1374, %v2470, 0.0
      %2481 = vadd.xlane.f32.xlu0 %v2480
      %v2482 = vpop.xlane.xlu0 %2481
      %v2483 = vsel %vm1374, %v2471, 0.0
      %2484 = vadd.xlane.f32.xlu0 %v2483
      %v2485 = vpop.xlane.xlu0 %2484
      %v2486 = vsel %vm1374, %v2472, 0.0
      %2487 = vadd.xlane.f32.xlu0 %v2486
      %v2488 = vpop.xlane.xlu0 %2487
      %v2489 = vsel %vm1374, %v2473, 0.0
      %2490 = vadd.xlane.f32.xlu0 %v2489
      %v2491 = vpop.xlane.xlu0 %2490
      %v2492 = vsel %vm1374, %v2474, 0.0
      %2493 = vadd.xlane.f32.xlu0 %v2492
      %v2494 = vpop.xlane.xlu0 %2493
      %v2495 = vsel %vm1374, %v2475, 0.0
      %2496 = vadd.xlane.f32.xlu0 %v2495
      %v2497 = vpop.xlane.xlu0 %2496
      %v2498 = vsel %vm1374, %v2476, 0.0
      %2499 = vadd.xlane.f32.xlu0 %v2498
      %v2500 = vpop.xlane.xlu0 %2499
      %v2501 = vmul.f32 %v2447, 0.015625
      %v2502 = vmul.f32 %v2450, 0.015625
      %v2503 = vmul.f32 %v2453, 0.015625
      %v2504 = vmul.f32 %v2456, 0.015625
      %v2505 = vmul.f32 %v2459, 0.015625
      %v2506 = vmul.f32 %v2462, 0.015625
      %v2507 = vmul.f32 %v2465, 0.015625
      %v2508 = vmul.f32 %v2468, 0.015625
      %v2509 = vmul.f32 %v2479, 0.015625
      %v2510 = vmul.f32 %v2482, 0.015625
      %v2511 = vmul.f32 %v2485, 0.015625
      %v2512 = vmul.f32 %v2488, 0.015625
      %v2513 = vmul.f32 %v2491, 0.015625
      %v2514 = vmul.f32 %v2494, 0.015625
      %v2515 = vmul.f32 %v2497, 0.015625
      %v2516 = vmul.f32 %v2500, 0.015625
      %v2517 = vmul.f32 %v2501, %v2501
      %v2518 = vmul.f32 %v2502, %v2502
      %v2519 = vmul.f32 %v2503, %v2503
      %v2520 = vmul.f32 %v2504, %v2504
      %v2521 = vmul.f32 %v2505, %v2505
      %v2522 = vmul.f32 %v2506, %v2506
      %v2523 = vmul.f32 %v2507, %v2507
      %v2524 = vmul.f32 %v2508, %v2508
      %v2525 = vsub.f32 %v2509, %v2517
      %v2526 = vsub.f32 %v2510, %v2518
      %v2527 = vsub.f32 %v2511, %v2519
      %v2528 = vsub.f32 %v2512, %v2520
      %v2529 = vsub.f32 %v2513, %v2521
      %v2530 = vsub.f32 %v2514, %v2522
      %v2531 = vsub.f32 %v2515, %v2523
      %v2532 = vsub.f32 %v2516, %v2524
      %v2533 = vadd.f32 %v2525, 1e-05
      %v2534 = vadd.f32 %v2526, 1e-05
      %v2535 = vadd.f32 %v2527, 1e-05
      %v2536 = vadd.f32 %v2528, 1e-05
      %v2537 = vadd.f32 %v2529, 1e-05
      %v2538 = vadd.f32 %v2530, 1e-05
      %v2539 = vadd.f32 %v2531, 1e-05
      %v2540 = vadd.f32 %v2532, 1e-05
      %v2541 = vrsqrt.pop %v2533
      %v2542 = vrsqrt.pop %v2534
      %v2543 = vrsqrt.pop %v2535
      %v2544 = vrsqrt.pop %v2536
      %v2545 = vrsqrt.pop %v2537
      %v2546 = vrsqrt.pop %v2538
      %v2547 = vrsqrt.pop %v2539
      %v2548 = vrsqrt.pop %v2540
      %v2549 = vmul.f32 %v2541, %v1358
      %v2550 = vmul.f32 %v2542, %v1359
      %v2551 = vmul.f32 %v2543, %v1360
      %v2552 = vmul.f32 %v2544, %v1361
      %v2553 = vmul.f32 %v2545, %v1362
      %v2554 = vmul.f32 %v2546, %v1363
      %v2555 = vmul.f32 %v2547, %v1364
      %v2556 = vmul.f32 %v2548, %v1365
      %v2557 = vsub.f32 %v2407, %v2501
      %v2558 = vsub.f32 %v2412, %v2502
      %v2559 = vsub.f32 %v2417, %v2503
      %v2560 = vsub.f32 %v2422, %v2504
      %v2561 = vsub.f32 %v2427, %v2505
      %v2562 = vsub.f32 %v2432, %v2506
      %v2563 = vsub.f32 %v2437, %v2507
      %v2564 = vsub.f32 %v2442, %v2508
      %2566 = vset.pattern.permute.xlu0 0
      %2567 = vperm.xlu0 %2566, %v2549
      %v2568 = vpop.permute.xlu0 %2567
      %2571 = vset.pattern.permute.xlu0 0
      %2572 = vperm.xlu0 %2571, %v2550
      %v2573 = vpop.permute.xlu0 %2572
      %2576 = vset.pattern.permute.xlu0 0
      %2577 = vperm.xlu0 %2576, %v2551
      %v2578 = vpop.permute.xlu0 %2577
      %2581 = vset.pattern.permute.xlu0 0
      %2582 = vperm.xlu0 %2581, %v2552
      %v2583 = vpop.permute.xlu0 %2582
      %2586 = vset.pattern.permute.xlu0 0
      %2587 = vperm.xlu0 %2586, %v2553
      %v2588 = vpop.permute.xlu0 %2587
      %2591 = vset.pattern.permute.xlu0 0
      %2592 = vperm.xlu0 %2591, %v2554
      %v2593 = vpop.permute.xlu0 %2592
      %2596 = vset.pattern.permute.xlu0 0
      %2597 = vperm.xlu0 %2596, %v2555
      %v2598 = vpop.permute.xlu0 %2597
      %2601 = vset.pattern.permute.xlu0 0
      %2602 = vperm.xlu0 %2601, %v2556
      %v2603 = vpop.permute.xlu0 %2602
      %v2605 = vmul.f32 %v2557, %v2568
      %v2606 = vmul.f32 %v2558, %v2573
      %v2607 = vmul.f32 %v2559, %v2578
      %v2608 = vmul.f32 %v2560, %v2583
      %v2609 = vmul.f32 %v2561, %v2588
      %v2610 = vmul.f32 %v2562, %v2593
      %v2611 = vmul.f32 %v2563, %v2598
      %v2612 = vmul.f32 %v2564, %v2603
      %2614 = vset.pattern.permute.xlu0 0
      %2615 = vperm.xlu0 %2614, %v1366
      %v2616 = vpop.permute.xlu0 %2615
      %2619 = vset.pattern.permute.xlu0 0
      %2620 = vperm.xlu0 %2619, %v1367
      %v2621 = vpop.permute.xlu0 %2620
      %2624 = vset.pattern.permute.xlu0 0
      %2625 = vperm.xlu0 %2624, %v1368
      %v2626 = vpop.permute.xlu0 %2625
      %2629 = vset.pattern.permute.xlu0 0
      %2630 = vperm.xlu0 %2629, %v1369
      %v2631 = vpop.permute.xlu0 %2630
      %2634 = vset.pattern.permute.xlu0 0
      %2635 = vperm.xlu0 %2634, %v1370
      %v2636 = vpop.permute.xlu0 %2635
      %2639 = vset.pattern.permute.xlu0 0
      %2640 = vperm.xlu0 %2639, %v1371
      %v2641 = vpop.permute.xlu0 %2640
      %2644 = vset.pattern.permute.xlu0 0
      %2645 = vperm.xlu0 %2644, %v1372
      %v2646 = vpop.permute.xlu0 %2645
      %2649 = vset.pattern.permute.xlu0 0
      %2650 = vperm.xlu0 %2649, %v1373
      %v2651 = vpop.permute.xlu0 %2650
      %v2653 = vadd.f32 %v2605, %v2616
      %v2654 = vadd.f32 %v2606, %v2621
      %v2655 = vadd.f32 %v2607, %v2626
      %v2656 = vadd.f32 %v2608, %v2631
      %v2657 = vadd.f32 %v2609, %v2636
      %v2658 = vadd.f32 %v2610, %v2641
      %v2659 = vadd.f32 %v2611, %v2646
      %v2660 = vadd.f32 %v2612, %v2651
      %v2661 = vmax.f32 %v2653, 0.0
      %v2662 = vmax.f32 %v2654, 0.0
      %v2663 = vmax.f32 %v2655, 0.0
      %v2664 = vmax.f32 %v2656, 0.0
      %v2665 = vmax.f32 %v2657, 0.0
      %v2666 = vmax.f32 %v2658, 0.0
      %v2667 = vmax.f32 %v2659, 0.0
      %v2668 = vmax.f32 %v2660, 0.0
      %v2669 = vadd.f32 %v1316, %v2661
      %v2670 = vadd.f32 %v1317, %v2662
      %v2671 = vadd.f32 %v1318, %v2663
      %v2672 = vadd.f32 %v1319, %v2664
      %v2673 = vadd.f32 %v1320, %v2665
      %v2674 = vadd.f32 %v1321, %v2666
      %v2675 = vadd.f32 %v1322, %v2667
      %v2676 = vadd.f32 %v1323, %v2668
      %2677 = vst.msk [vmem:[#allocation2] sm:$0xff] %vm1374, %v2669
      %2678 = vst.msk [vmem:[#allocation2 + $0x8] sm:$0xff] %vm1374, %v2670
      %2679 = vst.msk [vmem:[#allocation2 + $0x10] sm:$0xff] %vm1374, %v2671
      %2680 = vst.msk [vmem:[#allocation2 + $0x18] sm:$0xff] %vm1374, %v2672
      %2681 = vst.msk [vmem:[#allocation2 + $0x20] sm:$0xff] %vm1374, %v2673
      %2682 = vst.msk [vmem:[#allocation2 + $0x28] sm:$0xff] %vm1374, %v2674
      %2683 = vst.msk [vmem:[#allocation2 + $0x30] sm:$0xff] %vm1374, %v2675
      %2684 = vst.msk [vmem:[#allocation2 + $0x38] sm:$0xff] %vm1374, %v2676
      %2685 = vst.msk [vmem:[%s540] sm:$0xff] %vm1374, %v2669
      %2686 = vst.msk [vmem:[%s540 + $0x8] sm:$0xff] %vm1374, %v2670
      %2687 = vst.msk [vmem:[%s540 + $0x10] sm:$0xff] %vm1374, %v2671
      %2688 = vst.msk [vmem:[%s540 + $0x18] sm:$0xff] %vm1374, %v2672
      %2689 = vst.msk [vmem:[%s540 + $0x20] sm:$0xff] %vm1374, %v2673
      %2690 = vst.msk [vmem:[%s540 + $0x28] sm:$0xff] %vm1374, %v2674
      %2691 = vst.msk [vmem:[%s540 + $0x30] sm:$0xff] %vm1374, %v2675
      %2692 = vst.msk [vmem:[%s540 + $0x38] sm:$0xff] %vm1374, %v2676
      %p2693 = scmp.lt.s32.totalorder %s24, 15
      %s2694 = scalar_select %p2693, %s24, 15
      %s2695 = smul.addr %s2694, 8
      %s2696 = smul.addr %s2695, 8
      %s2697 = scalar_lea.vmem %s13, %s2696
      // Predicated region
      $region77: #{point_transformer_last_forward.1} parent=71 // pred_check
        %p2698 = pneg %p345
      $region78: #{point_transformer_last_forward.1} parent=71 // pred_check_branch
        %2700 = sbr.rel (%p2698) target = $region80
      $region79: #{point_transformer_last_forward.1} parent=71 // pred_region
        _
      $region80: #{point_transformer_last_forward.1} parent=71 // pred_fallthru
        _
    $region72: #{point_transformer_last_forward.1} parent=5 // pred_fallthru
      _
    %p2701 = scmp.le.s32.totalorder 2, %s19
    // Predicated region
    $region81: #{point_transformer_last_forward.1} parent=5 // pred_check
      %p2702 = pneg %p2701
    $region82: #{point_transformer_last_forward.1} parent=5 // pred_check_branch
      %2704 = sbr.rel (%p2702) target = $region84
    $region83: #{point_transformer_last_forward.1} parent=5 // pred_region
      %s2705 = ssub.s32 %s19, 2
      // Predicated region
      $region85: #{point_transformer_last_forward.1} parent=83 // pred_check
        %p2706 = pneg %p351
      $region86: #{point_transformer_last_forward.1} parent=83 // pred_check_branch
        %2708 = sbr.rel (%p2706) target = $region88
      $region87: #{point_transformer_last_forward.1} parent=83 // pred_region
        %p2709 = scmp.lt.s32.totalorder %s25, 15
        %s2710 = scalar_select %p2709, %s25, 15
        %s2711 = smul.addr %s2710, 8
        %s2712 = smul.addr %s2711, 8
        %s2713 = scalar_lea.vmem %s13, %s2712
      $region88: #{point_transformer_last_forward.1} parent=83 // pred_fallthru
        _
    $region84: #{point_transformer_last_forward.1} parent=5 // pred_fallthru
      _
  $region6: #{point_transformer_last_forward.1} parent=0 // loop_footer
    %s23 = sadd.s32 1, %s19
  $region7: #{point_transformer_last_forward.1} parent=0 // loop_footer_branch
    %18 = sbr.rel target = $region3
  $region8: #{point_transformer_last_forward.1} parent=0 // loop_exit
    _

</llo_original>
